<compile_context>
chip_gen: v7x
topology: tpu7x:2x2x1
jax: 0.10.0
libtpu: 0.0.40
codegen_flags: <defaults>
</compile_context>

<pallas_src>
import numpy as np
import jax
import jax.numpy as jnp
from jax.experimental import pallas as pl
from jax.experimental.pallas import tpu as pltpu

EPS = 1e-5
SLOPE = 0.01                      # nn.LeakyReLU default negative_slope
PREC = jax.lax.Precision.HIGHEST  # used only by the pure-JAX reference


def _leaky(x):
    return jnp.where(x > 0, x, SLOPE * x)


def _round_up(v, m):
    return ((v + m - 1) // m) * m


def _make_kernel(N, Lp, Pp, count):
    """Kernel closure over the static layout constants."""
    inv_cnt = 1.0 / float(count)   # 1 / (N * L)   for BatchNorm stats
    inv_lp = 1.0 / float(Lp)       # AdaptiveAvgPool1d(1) over the pooled length

    def kernel(xp_ref, g1_ref, be1_ref, w1_ref, cb1_ref, g2_ref, be2_ref,
               w2_ref, cb2_ref, wd_ref, bd_ref, wfc_ref, bfc_ref,
               valid_ref, ml_ref, mr_ref, seg_ref, o_ref):
        valid = valid_ref[...]     # (1, Pp) 1.0 on valid (n, lp) columns
        ml = ml_ref[...]           # (1, Pp) 0.0 where lp == 0 of each batch segment
        mr = mr_ref[...]           # (1, Pp) 0.0 where lp == Lp-1 of each batch segment

        def bn(ps, gamma, beta):
            # training-mode BatchNorm1d: per-channel stats over all valid columns
            s1 = (jnp.sum(ps[0] * valid, axis=1, keepdims=True)
                  + jnp.sum(ps[1] * valid, axis=1, keepdims=True)
                  + jnp.sum(ps[2] * valid, axis=1, keepdims=True))
            mu = s1 * inv_cnt
            s2 = (jnp.sum(((ps[0] - mu) * valid) ** 2, axis=1, keepdims=True)
                  + jnp.sum(((ps[1] - mu) * valid) ** 2, axis=1, keepdims=True)
                  + jnp.sum(((ps[2] - mu) * valid) ** 2, axis=1, keepdims=True))
            var = s2 * inv_cnt
            scale = gamma * jax.lax.rsqrt(var + EPS)
            shift = beta - scale * mu
            return [p * scale + shift for p in ps]

        def conv3(ps, w, b):
            # Conv1d(k=3, pad=1) on polyphase planes; w is (Cout, 3*Cin) packed as
            # [tap(l-1) | tap(l) | tap(l+1)] blocks of Cin columns each.
            h0, h1, h2 = ps
            prev2 = pltpu.roll(h2, shift=1, axis=1) * ml        # value at l-1 for phase 0
            next0 = pltpu.roll(h0, shift=Pp - 1, axis=1) * mr   # value at l+1 for phase 2
            y0 = jnp.dot(w, jnp.concatenate([prev2, h0, h1], axis=0),
                         preferred_element_type=jnp.float32) + b
            y1 = jnp.dot(w, jnp.concatenate([h0, h1, h2], axis=0),
                         preferred_element_type=jnp.float32) + b
            y2 = jnp.dot(w, jnp.concatenate([h1, h2, next0], axis=0),
                         preferred_element_type=jnp.float32) + b
            return [y0, y1, y2]

        # polyphase input planes: xs[k][c, n*Lp + lp] = x[n, c, 3*lp + k]
        xs = [xp_ref[0], xp_ref[1], xp_ref[2]]                  # each (Ci, Pp)

        # Sequential(BatchNorm1d, LeakyReLU)
        hs = [_leaky(p) for p in bn(xs, g1_ref[...], be1_ref[...])]

        # convolutions: Conv1d -> BatchNorm1d -> Conv1d -> LeakyReLU
        ys = conv3(hs, w1_ref[...], cb1_ref[...])
        ys = bn(ys, g2_ref[...], be2_ref[...])
        ys = conv3(ys, w2_ref[...], cb2_ref[...])
        ans = [_leaky(y) for y in ys]

        # down_sample: Conv1d(kernel=1) on the original input
        wd = wd_ref[...]
        bd = bd_ref[...]
        zs = [a + jnp.dot(wd, x, preferred_element_type=jnp.float32) + bd
              for a, x in zip(ans, xs)]

        # MaxPool1d(3): elementwise max over the three phases (pure VPU)
        pooled = jnp.maximum(jnp.maximum(zs[0], zs[1]), zs[2])  # (Cc, Pp)

        # AdaptiveAvgPool1d(1) -> Linear -> Sigmoid, per batch segment, then broadcast
        wfc = wfc_ref[...]
        bfc = bfc_ref[...]
        seg = seg_ref[...]                                      # (N, Pp) segment masks
        gate_full = jnp.zeros_like(pooled)
        for n in range(N):                                      # N is small; unrolled
            m = seg[n:n + 1, :]                                 # (1, Pp)
            avg_n = jnp.sum(pooled * m, axis=1, keepdims=True) * inv_lp   # (Cc, 1)
            g_n = jax.nn.sigmoid(
                jnp.dot(wfc, avg_n, preferred_element_type=jnp.float32) + bfc)
            gate_full = gate_full + g_n * m                     # broadcast over segment

        o_ref[...] = (pooled + 1.0) * gate_full                 # dense (Cc, Pp) store

    return kernel


def resnet_forward(x, p):
    """x: (N, Ci, L) float32 -> (N, Cc, L//3) float32 (ResNet.forward, first_norm=True)."""
    N, Ci, L = x.shape
    Cc = p["w_down"].shape[0]
    if L % 3 != 0:
        raise ValueError("L must be a multiple of 3 (MaxPool1d(3) floor semantics)")
    Lp = L // 3
    NLp = N * Lp
    Pp = _round_up(NLp, 128)      # lane-dense padded plane width
    count = N * L                 # BatchNorm population size

    # ---- layout glue: (N, Ci, L) -> polyphase planes (3, Ci, Pp), lane = n*Lp + lp ----
    xr = jnp.transpose(x, (1, 0, 2)).reshape(Ci, N, Lp, 3)
    planes = jnp.transpose(xr, (3, 0, 1, 2)).reshape(3, Ci, NLp)
    planes = jnp.pad(planes, ((0, 0), (0, 0), (0, Pp - NLp)))

    # ---- im2col-packed conv weights: [tap(l-1) | tap(l) | tap(l+1)] ----
    w1p = jnp.concatenate([p["w_conv1"][:, :, t] for t in range(3)], axis=1)  # (Cc, 3*Ci)
    w2p = jnp.concatenate([p["w_conv2"][:, :, t] for t in range(3)], axis=1)  # (Cc, 3*Cc)

    # ---- tiny precomputed masks (host numpy; replaces S/G/A/B matrices) ----
    valid = np.zeros((1, Pp), np.float32)
    valid[0, :NLp] = 1.0
    mask_l = np.zeros((1, Pp), np.float32)
    mask_r = np.zeros((1, Pp), np.float32)
    seg = np.zeros((N, Pp), np.float32)
    for n in range(N):
        seg[n, n * Lp:(n + 1) * Lp] = 1.0
        mask_l[0, n * Lp + 1:(n + 1) * Lp] = 1.0     # zero at lp == 0 (left conv padding)
        mask_r[0, n * Lp:(n + 1) * Lp - 1] = 1.0     # zero at lp == Lp-1 (right padding)

    ins = (planes,
           p["gamma1"].reshape(Ci, 1), p["beta1"].reshape(Ci, 1),
           w1p, p["b_conv1"].reshape(Cc, 1),
           p["gamma2"].reshape(Cc, 1), p["beta2"].reshape(Cc, 1),
           w2p, p["b_conv2"].reshape(Cc, 1),
           p["w_down"], p["b_down"].reshape(Cc, 1),
           p["w_fc"], p["b_fc"].reshape(Cc, 1),
           jnp.asarray(valid), jnp.asarray(mask_l), jnp.asarray(mask_r),
           jnp.asarray(seg))

    in_bytes = sum(int(np.prod(a.shape)) * 4 for a in ins)
    out_bytes = Cc * Pp * 4
    flops = (2 * 3 * Pp * (Cc * 3 * Ci + Cc * 3 * Cc + Cc * Ci)   # convs + down_sample
             + 2 * N * Cc * Cc                                    # fc gate
             + 40 * (Ci + 2 * Cc) * 3 * Pp)                       # elementwise (rough)
    cost = pl.CostEstimate(flops=int(flops),
                           transcendentals=int(N * Cc + 2 * (Ci + Cc)),
                           bytes_accessed=int(in_bytes + out_bytes))

    kernel = _make_kernel(N, Lp, Pp, count)
    out2 = pl.pallas_call(
        kernel,
        out_shape=jax.ShapeDtypeStruct((Cc, Pp), jnp.float32),
        in_specs=[pl.BlockSpec(memory_space=pltpu.MemorySpace.VMEM) for _ in ins],
        out_specs=pl.BlockSpec(memory_space=pltpu.MemorySpace.VMEM),
        compiler_params=pltpu.CompilerParams(vmem_limit_bytes=32 * 1024 * 1024),
        cost_estimate=cost,
    )(*ins)

    # ---- layout glue back: (Cc, Pp) -> (N, Cc, Lp) ----
    out = out2[:, :NLp].reshape(Cc, N, Lp)
    return jnp.transpose(out, (1, 0, 2))


def ref_forward(x, r):
    """Pure-JAX reference mirroring the PyTorch module (NCL layout, f32/HIGHEST)."""
    def bn(y, g, b):
        mu = y.mean(axis=(0, 2), keepdims=True)
        var = ((y - mu) ** 2).mean(axis=(0, 2), keepdims=True)
        return g.reshape(1, -1, 1) * (y - mu) / jnp.sqrt(var + EPS) + b.reshape(1, -1, 1)

    def conv(y, w, b, pad):
        out = jax.lax.conv_general_dilated(
            y, w, window_strides=(1,), padding=[(pad, pad)],
            dimension_numbers=("NCH", "OIH", "NCH"), precision=PREC)
        return out + b.reshape(1, -1, 1)

    h = _leaky(bn(x, r["gamma1"], r["beta1"]))
    y = conv(h, r["w_conv1"], r["b_conv1"], 1)
    y = bn(y, r["gamma2"], r["beta2"])
    y = conv(y, r["w_conv2"], r["b_conv2"], 1)
    ans = _leaky(y)
    xd = conv(x, r["w_down"][:, :, None], r["b_down"], 0)
    z = ans + xd
    N, Cc, L = z.shape
    pooled = z.reshape(N, Cc, L // 3, 3).max(axis=-1)
    avg = pooled.mean(axis=-1)                                     # (N, Cc)
    gate = jax.nn.sigmoid(avg @ r["w_fc"].T + r["b_fc"])           # (N, Cc)
    return (pooled + 1.0) * gate[:, :, None]


if __name__ == "__main__":
    N, Ci, Cc, L = 2, 4, 8, 24     # input_channels=4, convolution_channels=8, seq len 24
    Lp = L // 3

    key = jax.random.PRNGKey(0)
    keys = jax.random.split(key, 13)
    x = jax.random.normal(keys[0], (N, Ci, L), jnp.float32)

    def nrm(k, shape, scale=0.1):
        return scale * jax.random.normal(k, shape, jnp.float32)

    params = dict(
        gamma1=1.0 + nrm(keys[1], (Ci,)),
        beta1=nrm(keys[2], (Ci,)),
        w_conv1=nrm(keys[3], (Cc, Ci, 3), 0.3),
        b_conv1=nrm(keys[4], (Cc,)),
        gamma2=1.0 + nrm(keys[5], (Cc,)),
        beta2=nrm(keys[6], (Cc,)),
        w_conv2=nrm(keys[7], (Cc, Cc, 3), 0.3),
        b_conv2=nrm(keys[8], (Cc,)),
        w_down=nrm(keys[9], (Cc, Ci), 0.3),
        b_down=nrm(keys[10], (Cc,)),
        w_fc=nrm(keys[11], (Cc, Cc), 0.3),
        b_fc=nrm(keys[12], (Cc,)),
    )

    out = jax.block_until_ready(resnet_forward(x, params))
    ref = ref_forward(x, params)

    assert out.shape == (N, Cc, Lp), out.shape
    err = float(jnp.max(jnp.abs(out - ref)))
    # MXU matmuls run at DEFAULT precision (single bf16 pass) -> small truncation error
    assert err < 5e-2, f"kernel/reference mismatch, max abs err = {err}"
    print("KERNEL_OK")
</pallas_src>

<mosaic_0001>
module attributes {stable_mosaic.version = 11 : i64} {
  func.func @kernel(%arg0: memref<3x4x128xf32, #tpu.memory_space<vmem>>, %arg1: memref<4x1xf32, #tpu.memory_space<vmem>>, %arg2: memref<4x1xf32, #tpu.memory_space<vmem>>, %arg3: memref<8x12xf32, #tpu.memory_space<vmem>>, %arg4: memref<8x1xf32, #tpu.memory_space<vmem>>, %arg5: memref<8x1xf32, #tpu.memory_space<vmem>>, %arg6: memref<8x1xf32, #tpu.memory_space<vmem>>, %arg7: memref<8x24xf32, #tpu.memory_space<vmem>>, %arg8: memref<8x1xf32, #tpu.memory_space<vmem>>, %arg9: memref<8x4xf32, #tpu.memory_space<vmem>>, %arg10: memref<8x1xf32, #tpu.memory_space<vmem>>, %arg11: memref<8x8xf32, #tpu.memory_space<vmem>>, %arg12: memref<8x1xf32, #tpu.memory_space<vmem>>, %arg13: memref<1x128xf32, #tpu.memory_space<vmem>>, %arg14: memref<1x128xf32, #tpu.memory_space<vmem>>, %arg15: memref<1x128xf32, #tpu.memory_space<vmem>>, %arg16: memref<2x128xf32, #tpu.memory_space<vmem>>, %arg17: memref<8x128xf32, #tpu.memory_space<vmem>>) attributes {dimension_semantics = [], scalar_prefetch = 0 : i64, scratch_operands = 0 : i64, tpu.core_type = #tpu.core_type<tc>} {
    %c0 = arith.constant 0 : index
    %c0_0 = arith.constant 0 : index
    %0 = vector.load %arg13[%c0, %c0_0] : memref<1x128xf32, #tpu.memory_space<vmem>>, vector<1x128xf32>
    %c0_1 = arith.constant 0 : index
    %c0_2 = arith.constant 0 : index
    %1 = vector.load %arg14[%c0_1, %c0_2] : memref<1x128xf32, #tpu.memory_space<vmem>>, vector<1x128xf32>
    %c0_3 = arith.constant 0 : index
    %c0_4 = arith.constant 0 : index
    %2 = vector.load %arg15[%c0_3, %c0_4] : memref<1x128xf32, #tpu.memory_space<vmem>>, vector<1x128xf32>
    %c0_5 = arith.constant 0 : index
    %c0_6 = arith.constant 0 : index
    %c0_7 = arith.constant 0 : index
    %3 = vector.load %arg0[%c0_5, %c0_6, %c0_7] : memref<3x4x128xf32, #tpu.memory_space<vmem>>, vector<1x4x128xf32>
    %4 = vector.shape_cast %3 : vector<1x4x128xf32> to vector<4x128xf32>
    %c1 = arith.constant 1 : index
    %c0_8 = arith.constant 0 : index
    %c0_9 = arith.constant 0 : index
    %5 = vector.load %arg0[%c1, %c0_8, %c0_9] : memref<3x4x128xf32, #tpu.memory_space<vmem>>, vector<1x4x128xf32>
    %6 = vector.shape_cast %5 : vector<1x4x128xf32> to vector<4x128xf32>
    %c2 = arith.constant 2 : index
    %c0_10 = arith.constant 0 : index
    %c0_11 = arith.constant 0 : index
    %7 = vector.load %arg0[%c2, %c0_10, %c0_11] : memref<3x4x128xf32, #tpu.memory_space<vmem>>, vector<1x4x128xf32>
    %8 = vector.shape_cast %7 : vector<1x4x128xf32> to vector<4x128xf32>
    %c0_12 = arith.constant 0 : index
    %c0_13 = arith.constant 0 : index
    %9 = vector.load %arg1[%c0_12, %c0_13] : memref<4x1xf32, #tpu.memory_space<vmem>>, vector<4x1xf32>
    %c0_14 = arith.constant 0 : index
    %c0_15 = arith.constant 0 : index
    %10 = vector.load %arg2[%c0_14, %c0_15] : memref<4x1xf32, #tpu.memory_space<vmem>>, vector<4x1xf32>
    %11 = vector.broadcast %0 : vector<1x128xf32> to vector<4x128xf32>
    %12 = arith.mulf %4, %11 : vector<4x128xf32>
    %cst = arith.constant dense<0.000000e+00> : vector<4xf32>
    %13 = vector.multi_reduction <add>, %12, %cst [1] : vector<4x128xf32> to vector<4xf32>
    %14 = vector.shape_cast %13 : vector<4xf32> to vector<4x1xf32>
    %15 = vector.broadcast %0 : vector<1x128xf32> to vector<4x128xf32>
    %16 = arith.mulf %6, %15 : vector<4x128xf32>
    %cst_16 = arith.constant dense<0.000000e+00> : vector<4xf32>
    %17 = vector.multi_reduction <add>, %16, %cst_16 [1] : vector<4x128xf32> to vector<4xf32>
    %18 = vector.shape_cast %17 : vector<4xf32> to vector<4x1xf32>
    %19 = arith.addf %14, %18 : vector<4x1xf32>
    %20 = vector.broadcast %0 : vector<1x128xf32> to vector<4x128xf32>
    %21 = arith.mulf %8, %20 : vector<4x128xf32>
    %cst_17 = arith.constant dense<0.000000e+00> : vector<4xf32>
    %22 = vector.multi_reduction <add>, %21, %cst_17 [1] : vector<4x128xf32> to vector<4xf32>
    %23 = vector.shape_cast %22 : vector<4xf32> to vector<4x1xf32>
    %24 = arith.addf %19, %23 : vector<4x1xf32>
    %cst_18 = arith.constant 0.020833334 : f32
    %25 = vector.broadcast %cst_18 : f32 to vector<4x1xf32>
    %26 = arith.mulf %24, %25 : vector<4x1xf32>
    %27 = vector.broadcast %26 : vector<4x1xf32> to vector<4x128xf32>
    %28 = arith.subf %4, %27 : vector<4x128xf32>
    %29 = vector.broadcast %0 : vector<1x128xf32> to vector<4x128xf32>
    %30 = arith.mulf %28, %29 : vector<4x128xf32>
    %31 = arith.mulf %30, %30 : vector<4x128xf32>
    %cst_19 = arith.constant dense<0.000000e+00> : vector<4xf32>
    %32 = vector.multi_reduction <add>, %31, %cst_19 [1] : vector<4x128xf32> to vector<4xf32>
    %33 = vector.shape_cast %32 : vector<4xf32> to vector<4x1xf32>
    %34 = vector.broadcast %26 : vector<4x1xf32> to vector<4x128xf32>
    %35 = arith.subf %6, %34 : vector<4x128xf32>
    %36 = vector.broadcast %0 : vector<1x128xf32> to vector<4x128xf32>
    %37 = arith.mulf %35, %36 : vector<4x128xf32>
    %38 = arith.mulf %37, %37 : vector<4x128xf32>
    %cst_20 = arith.constant dense<0.000000e+00> : vector<4xf32>
    %39 = vector.multi_reduction <add>, %38, %cst_20 [1] : vector<4x128xf32> to vector<4xf32>
    %40 = vector.shape_cast %39 : vector<4xf32> to vector<4x1xf32>
    %41 = arith.addf %33, %40 : vector<4x1xf32>
    %42 = vector.broadcast %26 : vector<4x1xf32> to vector<4x128xf32>
    %43 = arith.subf %8, %42 : vector<4x128xf32>
    %44 = vector.broadcast %0 : vector<1x128xf32> to vector<4x128xf32>
    %45 = arith.mulf %43, %44 : vector<4x128xf32>
    %46 = arith.mulf %45, %45 : vector<4x128xf32>
    %cst_21 = arith.constant dense<0.000000e+00> : vector<4xf32>
    %47 = vector.multi_reduction <add>, %46, %cst_21 [1] : vector<4x128xf32> to vector<4xf32>
    %48 = vector.shape_cast %47 : vector<4xf32> to vector<4x1xf32>
    %49 = arith.addf %41, %48 : vector<4x1xf32>
    %cst_22 = arith.constant 0.020833334 : f32
    %50 = vector.broadcast %cst_22 : f32 to vector<4x1xf32>
    %51 = arith.mulf %49, %50 : vector<4x1xf32>
    %cst_23 = arith.constant 9.99999974E-6 : f32
    %52 = vector.broadcast %cst_23 : f32 to vector<4x1xf32>
    %53 = arith.addf %51, %52 : vector<4x1xf32>
    %54 = math.rsqrt %53 : vector<4x1xf32>
    %55 = arith.mulf %9, %54 : vector<4x1xf32>
    %56 = arith.mulf %55, %26 : vector<4x1xf32>
    %57 = arith.subf %10, %56 : vector<4x1xf32>
    %58 = vector.broadcast %55 : vector<4x1xf32> to vector<4x128xf32>
    %59 = arith.mulf %4, %58 : vector<4x128xf32>
    %60 = vector.broadcast %57 : vector<4x1xf32> to vector<4x128xf32>
    %61 = arith.addf %59, %60 : vector<4x128xf32>
    %62 = vector.broadcast %55 : vector<4x1xf32> to vector<4x128xf32>
    %63 = arith.mulf %6, %62 : vector<4x128xf32>
    %64 = vector.broadcast %57 : vector<4x1xf32> to vector<4x128xf32>
    %65 = arith.addf %63, %64 : vector<4x128xf32>
    %66 = vector.broadcast %55 : vector<4x1xf32> to vector<4x128xf32>
    %67 = arith.mulf %8, %66 : vector<4x128xf32>
    %68 = vector.broadcast %57 : vector<4x1xf32> to vector<4x128xf32>
    %69 = arith.addf %67, %68 : vector<4x128xf32>
    %cst_24 = arith.constant 0.000000e+00 : f32
    %70 = vector.broadcast %cst_24 : f32 to vector<4x128xf32>
    %71 = arith.cmpf ogt, %61, %70 : vector<4x128xf32>
    %cst_25 = arith.constant 0.00999999977 : f32
    %72 = vector.broadcast %cst_25 : f32 to vector<4x128xf32>
    %73 = arith.mulf %72, %61 : vector<4x128xf32>
    %74 = arith.select %71, %61, %73 : vector<4x128xi1>, vector<4x128xf32>
    %cst_26 = arith.constant 0.000000e+00 : f32
    %75 = vector.broadcast %cst_26 : f32 to vector<4x128xf32>
    %76 = arith.cmpf ogt, %65, %75 : vector<4x128xf32>
    %cst_27 = arith.constant 0.00999999977 : f32
    %77 = vector.broadcast %cst_27 : f32 to vector<4x128xf32>
    %78 = arith.mulf %77, %65 : vector<4x128xf32>
    %79 = arith.select %76, %65, %78 : vector<4x128xi1>, vector<4x128xf32>
    %cst_28 = arith.constant 0.000000e+00 : f32
    %80 = vector.broadcast %cst_28 : f32 to vector<4x128xf32>
    %81 = arith.cmpf ogt, %69, %80 : vector<4x128xf32>
    %cst_29 = arith.constant 0.00999999977 : f32
    %82 = vector.broadcast %cst_29 : f32 to vector<4x128xf32>
    %83 = arith.mulf %82, %69 : vector<4x128xf32>
    %84 = arith.select %81, %69, %83 : vector<4x128xi1>, vector<4x128xf32>
    %c0_30 = arith.constant 0 : index
    %c0_31 = arith.constant 0 : index
    %85 = vector.load %arg3[%c0_30, %c0_31] : memref<8x12xf32, #tpu.memory_space<vmem>>, vector<8x12xf32>
    %c0_32 = arith.constant 0 : index
    %c0_33 = arith.constant 0 : index
    %86 = vector.load %arg4[%c0_32, %c0_33] : memref<8x1xf32, #tpu.memory_space<vmem>>, vector<8x1xf32>
    %c1_i32 = arith.constant 1 : i32
    %87 = tpu.dynamic_rotate %84 by %c1_i32 dim 1 : vector<4x128xf32>, i32 -> vector<4x128xf32>
    %88 = vector.broadcast %1 : vector<1x128xf32> to vector<4x128xf32>
    %89 = arith.mulf %87, %88 : vector<4x128xf32>
    %c127_i32 = arith.constant 127 : i32
    %90 = tpu.dynamic_rotate %74 by %c127_i32 dim 1 : vector<4x128xf32>, i32 -> vector<4x128xf32>
    %91 = vector.broadcast %2 : vector<1x128xf32> to vector<4x128xf32>
    %92 = arith.mulf %90, %91 : vector<4x128xf32>
    %93 = tpu.concatenate %89, %74, %79 in 0 : vector<4x128xf32>, vector<4x128xf32>, vector<4x128xf32> -> vector<12x128xf32>
    %cst_34 = arith.constant dense<0.000000e+00> : vector<8x128xf32>
    %94 = tpu.matmul %85, %93, %cst_34 {dimension_numbers = #tpu.dot_dimension_numbers<[1], [0], [0], [1], [0, 0, 1, 1], [], []>} : vector<8x12xf32>, vector<12x128xf32>, vector<8x128xf32> -> vector<8x128xf32>
    %95 = vector.broadcast %86 : vector<8x1xf32> to vector<8x128xf32>
    %96 = arith.addf %94, %95 : vector<8x128xf32>
    %97 = tpu.concatenate %74, %79, %84 in 0 : vector<4x128xf32>, vector<4x128xf32>, vector<4x128xf32> -> vector<12x128xf32>
    %cst_35 = arith.constant dense<0.000000e+00> : vector<8x128xf32>
    %98 = tpu.matmul %85, %97, %cst_35 {dimension_numbers = #tpu.dot_dimension_numbers<[1], [0], [0], [1], [0, 0, 1, 1], [], []>} : vector<8x12xf32>, vector<12x128xf32>, vector<8x128xf32> -> vector<8x128xf32>
    %99 = vector.broadcast %86 : vector<8x1xf32> to vector<8x128xf32>
    %100 = arith.addf %98, %99 : vector<8x128xf32>
    %101 = tpu.concatenate %79, %84, %92 in 0 : vector<4x128xf32>, vector<4x128xf32>, vector<4x128xf32> -> vector<12x128xf32>
    %cst_36 = arith.constant dense<0.000000e+00> : vector<8x128xf32>
    %102 = tpu.matmul %85, %101, %cst_36 {dimension_numbers = #tpu.dot_dimension_numbers<[1], [0], [0], [1], [0, 0, 1, 1], [], []>} : vector<8x12xf32>, vector<12x128xf32>, vector<8x128xf32> -> vector<8x128xf32>
    %103 = vector.broadcast %86 : vector<8x1xf32> to vector<8x128xf32>
    %104 = arith.addf %102, %103 : vector<8x128xf32>
    %c0_37 = arith.constant 0 : index
    %c0_38 = arith.constant 0 : index
    %105 = vector.load %arg5[%c0_37, %c0_38] : memref<8x1xf32, #tpu.memory_space<vmem>>, vector<8x1xf32>
    %c0_39 = arith.constant 0 : index
    %c0_40 = arith.constant 0 : index
    %106 = vector.load %arg6[%c0_39, %c0_40] : memref<8x1xf32, #tpu.memory_space<vmem>>, vector<8x1xf32>
    %107 = vector.broadcast %0 : vector<1x128xf32> to vector<8x128xf32>
    %108 = arith.mulf %96, %107 : vector<8x128xf32>
    %cst_41 = arith.constant dense<0.000000e+00> : vector<8xf32>
    %109 = vector.multi_reduction <add>, %108, %cst_41 [1] : vector<8x128xf32> to vector<8xf32>
    %110 = vector.shape_cast %109 : vector<8xf32> to vector<8x1xf32>
    %111 = vector.broadcast %0 : vector<1x128xf32> to vector<8x128xf32>
    %112 = arith.mulf %100, %111 : vector<8x128xf32>
    %cst_42 = arith.constant dense<0.000000e+00> : vector<8xf32>
    %113 = vector.multi_reduction <add>, %112, %cst_42 [1] : vector<8x128xf32> to vector<8xf32>
    %114 = vector.shape_cast %113 : vector<8xf32> to vector<8x1xf32>
    %115 = arith.addf %110, %114 : vector<8x1xf32>
    %116 = vector.broadcast %0 : vector<1x128xf32> to vector<8x128xf32>
    %117 = arith.mulf %104, %116 : vector<8x128xf32>
    %cst_43 = arith.constant dense<0.000000e+00> : vector<8xf32>
    %118 = vector.multi_reduction <add>, %117, %cst_43 [1] : vector<8x128xf32> to vector<8xf32>
    %119 = vector.shape_cast %118 : vector<8xf32> to vector<8x1xf32>
    %120 = arith.addf %115, %119 : vector<8x1xf32>
    %cst_44 = arith.constant 0.020833334 : f32
    %121 = vector.broadcast %cst_44 : f32 to vector<8x1xf32>
    %122 = arith.mulf %120, %121 : vector<8x1xf32>
    %123 = vector.broadcast %122 : vector<8x1xf32> to vector<8x128xf32>
    %124 = arith.subf %96, %123 : vector<8x128xf32>
    %125 = vector.broadcast %0 : vector<1x128xf32> to vector<8x128xf32>
    %126 = arith.mulf %124, %125 : vector<8x128xf32>
    %127 = arith.mulf %126, %126 : vector<8x128xf32>
    %cst_45 = arith.constant dense<0.000000e+00> : vector<8xf32>
    %128 = vector.multi_reduction <add>, %127, %cst_45 [1] : vector<8x128xf32> to vector<8xf32>
    %129 = vector.shape_cast %128 : vector<8xf32> to vector<8x1xf32>
    %130 = vector.broadcast %122 : vector<8x1xf32> to vector<8x128xf32>
    %131 = arith.subf %100, %130 : vector<8x128xf32>
    %132 = vector.broadcast %0 : vector<1x128xf32> to vector<8x128xf32>
    %133 = arith.mulf %131, %132 : vector<8x128xf32>
    %134 = arith.mulf %133, %133 : vector<8x128xf32>
    %cst_46 = arith.constant dense<0.000000e+00> : vector<8xf32>
    %135 = vector.multi_reduction <add>, %134, %cst_46 [1] : vector<8x128xf32> to vector<8xf32>
    %136 = vector.shape_cast %135 : vector<8xf32> to vector<8x1xf32>
    %137 = arith.addf %129, %136 : vector<8x1xf32>
    %138 = vector.broadcast %122 : vector<8x1xf32> to vector<8x128xf32>
    %139 = arith.subf %104, %138 : vector<8x128xf32>
    %140 = vector.broadcast %0 : vector<1x128xf32> to vector<8x128xf32>
    %141 = arith.mulf %139, %140 : vector<8x128xf32>
    %142 = arith.mulf %141, %141 : vector<8x128xf32>
    %cst_47 = arith.constant dense<0.000000e+00> : vector<8xf32>
    %143 = vector.multi_reduction <add>, %142, %cst_47 [1] : vector<8x128xf32> to vector<8xf32>
    %144 = vector.shape_cast %143 : vector<8xf32> to vector<8x1xf32>
    %145 = arith.addf %137, %144 : vector<8x1xf32>
    %cst_48 = arith.constant 0.020833334 : f32
    %146 = vector.broadcast %cst_48 : f32 to vector<8x1xf32>
    %147 = arith.mulf %145, %146 : vector<8x1xf32>
    %cst_49 = arith.constant 9.99999974E-6 : f32
    %148 = vector.broadcast %cst_49 : f32 to vector<8x1xf32>
    %149 = arith.addf %147, %148 : vector<8x1xf32>
    %150 = math.rsqrt %149 : vector<8x1xf32>
    %151 = arith.mulf %105, %150 : vector<8x1xf32>
    %152 = arith.mulf %151, %122 : vector<8x1xf32>
    %153 = arith.subf %106, %152 : vector<8x1xf32>
    %154 = vector.broadcast %151 : vector<8x1xf32> to vector<8x128xf32>
    %155 = arith.mulf %96, %154 : vector<8x128xf32>
    %156 = vector.broadcast %153 : vector<8x1xf32> to vector<8x128xf32>
    %157 = arith.addf %155, %156 : vector<8x128xf32>
    %158 = vector.broadcast %151 : vector<8x1xf32> to vector<8x128xf32>
    %159 = arith.mulf %100, %158 : vector<8x128xf32>
    %160 = vector.broadcast %153 : vector<8x1xf32> to vector<8x128xf32>
    %161 = arith.addf %159, %160 : vector<8x128xf32>
    %162 = vector.broadcast %151 : vector<8x1xf32> to vector<8x128xf32>
    %163 = arith.mulf %104, %162 : vector<8x128xf32>
    %164 = vector.broadcast %153 : vector<8x1xf32> to vector<8x128xf32>
    %165 = arith.addf %163, %164 : vector<8x128xf32>
    %c0_50 = arith.constant 0 : index
    %c0_51 = arith.constant 0 : index
    %166 = vector.load %arg7[%c0_50, %c0_51] : memref<8x24xf32, #tpu.memory_space<vmem>>, vector<8x24xf32>
    %c0_52 = arith.constant 0 : index
    %c0_53 = arith.constant 0 : index
    %167 = vector.load %arg8[%c0_52, %c0_53] : memref<8x1xf32, #tpu.memory_space<vmem>>, vector<8x1xf32>
    %c1_i32_54 = arith.constant 1 : i32
    %168 = tpu.dynamic_rotate %165 by %c1_i32_54 dim 1 : vector<8x128xf32>, i32 -> vector<8x128xf32>
    %169 = vector.broadcast %1 : vector<1x128xf32> to vector<8x128xf32>
    %170 = arith.mulf %168, %169 : vector<8x128xf32>
    %c127_i32_55 = arith.constant 127 : i32
    %171 = tpu.dynamic_rotate %157 by %c127_i32_55 dim 1 : vector<8x128xf32>, i32 -> vector<8x128xf32>
    %172 = vector.broadcast %2 : vector<1x128xf32> to vector<8x128xf32>
    %173 = arith.mulf %171, %172 : vector<8x128xf32>
    %174 = tpu.concatenate %170, %157, %161 in 0 : vector<8x128xf32>, vector<8x128xf32>, vector<8x128xf32> -> vector<24x128xf32>
    %cst_56 = arith.constant dense<0.000000e+00> : vector<8x128xf32>
    %175 = tpu.matmul %166, %174, %cst_56 {dimension_numbers = #tpu.dot_dimension_numbers<[1], [0], [0], [1], [0, 0, 1, 1], [], []>} : vector<8x24xf32>, vector<24x128xf32>, vector<8x128xf32> -> vector<8x128xf32>
    %176 = vector.broadcast %167 : vector<8x1xf32> to vector<8x128xf32>
    %177 = arith.addf %175, %176 : vector<8x128xf32>
    %178 = tpu.concatenate %157, %161, %165 in 0 : vector<8x128xf32>, vector<8x128xf32>, vector<8x128xf32> -> vector<24x128xf32>
    %cst_57 = arith.constant dense<0.000000e+00> : vector<8x128xf32>
    %179 = tpu.matmul %166, %178, %cst_57 {dimension_numbers = #tpu.dot_dimension_numbers<[1], [0], [0], [1], [0, 0, 1, 1], [], []>} : vector<8x24xf32>, vector<24x128xf32>, vector<8x128xf32> -> vector<8x128xf32>
    %180 = vector.broadcast %167 : vector<8x1xf32> to vector<8x128xf32>
    %181 = arith.addf %179, %180 : vector<8x128xf32>
    %182 = tpu.concatenate %161, %165, %173 in 0 : vector<8x128xf32>, vector<8x128xf32>, vector<8x128xf32> -> vector<24x128xf32>
    %cst_58 = arith.constant dense<0.000000e+00> : vector<8x128xf32>
    %183 = tpu.matmul %166, %182, %cst_58 {dimension_numbers = #tpu.dot_dimension_numbers<[1], [0], [0], [1], [0, 0, 1, 1], [], []>} : vector<8x24xf32>, vector<24x128xf32>, vector<8x128xf32> -> vector<8x128xf32>
    %184 = vector.broadcast %167 : vector<8x1xf32> to vector<8x128xf32>
    %185 = arith.addf %183, %184 : vector<8x128xf32>
    %cst_59 = arith.constant 0.000000e+00 : f32
    %186 = vector.broadcast %cst_59 : f32 to vector<8x128xf32>
    %187 = arith.cmpf ogt, %177, %186 : vector<8x128xf32>
    %cst_60 = arith.constant 0.00999999977 : f32
    %188 = vector.broadcast %cst_60 : f32 to vector<8x128xf32>
    %189 = arith.mulf %188, %177 : vector<8x128xf32>
    %190 = arith.select %187, %177, %189 : vector<8x128xi1>, vector<8x128xf32>
    %cst_61 = arith.constant 0.000000e+00 : f32
    %191 = vector.broadcast %cst_61 : f32 to vector<8x128xf32>
    %192 = arith.cmpf ogt, %181, %191 : vector<8x128xf32>
    %cst_62 = arith.constant 0.00999999977 : f32
    %193 = vector.broadcast %cst_62 : f32 to vector<8x128xf32>
    %194 = arith.mulf %193, %181 : vector<8x128xf32>
    %195 = arith.select %192, %181, %194 : vector<8x128xi1>, vector<8x128xf32>
    %cst_63 = arith.constant 0.000000e+00 : f32
    %196 = vector.broadcast %cst_63 : f32 to vector<8x128xf32>
    %197 = arith.cmpf ogt, %185, %196 : vector<8x128xf32>
    %cst_64 = arith.constant 0.00999999977 : f32
    %198 = vector.broadcast %cst_64 : f32 to vector<8x128xf32>
    %199 = arith.mulf %198, %185 : vector<8x128xf32>
    %200 = arith.select %197, %185, %199 : vector<8x128xi1>, vector<8x128xf32>
    %c0_65 = arith.constant 0 : index
    %c0_66 = arith.constant 0 : index
    %201 = vector.load %arg9[%c0_65, %c0_66] : memref<8x4xf32, #tpu.memory_space<vmem>>, vector<8x4xf32>
    %c0_67 = arith.constant 0 : index
    %c0_68 = arith.constant 0 : index
    %202 = vector.load %arg10[%c0_67, %c0_68] : memref<8x1xf32, #tpu.memory_space<vmem>>, vector<8x1xf32>
    %cst_69 = arith.constant dense<0.000000e+00> : vector<8x128xf32>
    %203 = tpu.matmul %201, %4, %cst_69 {dimension_numbers = #tpu.dot_dimension_numbers<[1], [0], [0], [1], [0, 0, 1, 1], [], []>} : vector<8x4xf32>, vector<4x128xf32>, vector<8x128xf32> -> vector<8x128xf32>
    %204 = arith.addf %190, %203 : vector<8x128xf32>
    %205 = vector.broadcast %202 : vector<8x1xf32> to vector<8x128xf32>
    %206 = arith.addf %204, %205 : vector<8x128xf32>
    %cst_70 = arith.constant dense<0.000000e+00> : vector<8x128xf32>
    %207 = tpu.matmul %201, %6, %cst_70 {dimension_numbers = #tpu.dot_dimension_numbers<[1], [0], [0], [1], [0, 0, 1, 1], [], []>} : vector<8x4xf32>, vector<4x128xf32>, vector<8x128xf32> -> vector<8x128xf32>
    %208 = arith.addf %195, %207 : vector<8x128xf32>
    %209 = vector.broadcast %202 : vector<8x1xf32> to vector<8x128xf32>
    %210 = arith.addf %208, %209 : vector<8x128xf32>
    %cst_71 = arith.constant dense<0.000000e+00> : vector<8x128xf32>
    %211 = tpu.matmul %201, %8, %cst_71 {dimension_numbers = #tpu.dot_dimension_numbers<[1], [0], [0], [1], [0, 0, 1, 1], [], []>} : vector<8x4xf32>, vector<4x128xf32>, vector<8x128xf32> -> vector<8x128xf32>
    %212 = arith.addf %200, %211 : vector<8x128xf32>
    %213 = vector.broadcast %202 : vector<8x1xf32> to vector<8x128xf32>
    %214 = arith.addf %212, %213 : vector<8x128xf32>
    %215 = arith.maximumf %206, %210 : vector<8x128xf32>
    %216 = arith.maximumf %215, %214 : vector<8x128xf32>
    %c0_72 = arith.constant 0 : index
    %c0_73 = arith.constant 0 : index
    %217 = vector.load %arg11[%c0_72, %c0_73] : memref<8x8xf32, #tpu.memory_space<vmem>>, vector<8x8xf32>
    %c0_74 = arith.constant 0 : index
    %c0_75 = arith.constant 0 : index
    %218 = vector.load %arg12[%c0_74, %c0_75] : memref<8x1xf32, #tpu.memory_space<vmem>>, vector<8x1xf32>
    %c0_76 = arith.constant 0 : index
    %c0_77 = arith.constant 0 : index
    %219 = vector.load %arg16[%c0_76, %c0_77] : memref<2x128xf32, #tpu.memory_space<vmem>>, vector<2x128xf32>
    %cst_78 = arith.constant 0.000000e+00 : f32
    %220 = vector.broadcast %cst_78 : f32 to vector<8x128xf32>
    %221 = vector.extract_strided_slice %219 {offsets = [0, 0], sizes = [1, 128], strides = [1, 1]} : vector<2x128xf32> to vector<1x128xf32>
    %222 = vector.broadcast %221 : vector<1x128xf32> to vector<8x128xf32>
    %223 = arith.mulf %216, %222 : vector<8x128xf32>
    %cst_79 = arith.constant dense<0.000000e+00> : vector<8xf32>
    %224 = vector.multi_reduction <add>, %223, %cst_79 [1] : vector<8x128xf32> to vector<8xf32>
    %225 = vector.shape_cast %224 : vector<8xf32> to vector<8x1xf32>
    %cst_80 = arith.constant 1.250000e-01 : f32
    %226 = vector.broadcast %cst_80 : f32 to vector<8x1xf32>
    %227 = arith.mulf %225, %226 : vector<8x1xf32>
    %cst_81 = arith.constant dense<0.000000e+00> : vector<8x1xf32>
    %228 = tpu.matmul %217, %227, %cst_81 {dimension_numbers = #tpu.dot_dimension_numbers<[1], [0], [0], [1], [0, 0, 1, 1], [], []>} : vector<8x8xf32>, vector<8x1xf32>, vector<8x1xf32> -> vector<8x1xf32>
    %229 = arith.addf %228, %218 : vector<8x1xf32>
    %230 = arith.negf %229 : vector<8x1xf32>
    %231 = math.exp %230 : vector<8x1xf32>
    %cst_82 = arith.constant 1.000000e+00 : f32
    %232 = vector.broadcast %cst_82 : f32 to vector<8x1xf32>
    %233 = arith.addf %232, %231 : vector<8x1xf32>
    %234 = arith.divf %232, %233 : vector<8x1xf32>
    %235 = vector.broadcast %234 : vector<8x1xf32> to vector<8x128xf32>
    %236 = vector.broadcast %221 : vector<1x128xf32> to vector<8x128xf32>
    %237 = arith.mulf %235, %236 : vector<8x128xf32>
    %238 = arith.addf %220, %237 : vector<8x128xf32>
    %239 = vector.extract_strided_slice %219 {offsets = [1, 0], sizes = [1, 128], strides = [1, 1]} : vector<2x128xf32> to vector<1x128xf32>
    %240 = vector.broadcast %239 : vector<1x128xf32> to vector<8x128xf32>
    %241 = arith.mulf %216, %240 : vector<8x128xf32>
    %cst_83 = arith.constant dense<0.000000e+00> : vector<8xf32>
    %242 = vector.multi_reduction <add>, %241, %cst_83 [1] : vector<8x128xf32> to vector<8xf32>
    %243 = vector.shape_cast %242 : vector<8xf32> to vector<8x1xf32>
    %cst_84 = arith.constant 1.250000e-01 : f32
    %244 = vector.broadcast %cst_84 : f32 to vector<8x1xf32>
    %245 = arith.mulf %243, %244 : vector<8x1xf32>
    %cst_85 = arith.constant dense<0.000000e+00> : vector<8x1xf32>
    %246 = tpu.matmul %217, %245, %cst_85 {dimension_numbers = #tpu.dot_dimension_numbers<[1], [0], [0], [1], [0, 0, 1, 1], [], []>} : vector<8x8xf32>, vector<8x1xf32>, vector<8x1xf32> -> vector<8x1xf32>
    %247 = arith.addf %246, %218 : vector<8x1xf32>
    %248 = arith.negf %247 : vector<8x1xf32>
    %249 = math.exp %248 : vector<8x1xf32>
    %cst_86 = arith.constant 1.000000e+00 : f32
    %250 = vector.broadcast %cst_86 : f32 to vector<8x1xf32>
    %251 = arith.addf %250, %249 : vector<8x1xf32>
    %252 = arith.divf %250, %251 : vector<8x1xf32>
    %253 = vector.broadcast %252 : vector<8x1xf32> to vector<8x128xf32>
    %254 = vector.broadcast %239 : vector<1x128xf32> to vector<8x128xf32>
    %255 = arith.mulf %253, %254 : vector<8x128xf32>
    %256 = arith.addf %238, %255 : vector<8x128xf32>
    %cst_87 = arith.constant 1.000000e+00 : f32
    %257 = vector.broadcast %cst_87 : f32 to vector<8x128xf32>
    %258 = arith.addf %216, %257 : vector<8x128xf32>
    %259 = arith.mulf %258, %256 : vector<8x128xf32>
    %c0_88 = arith.constant 0 : index
    %c0_89 = arith.constant 0 : index
    %260 = vector.load %arg17[%c0_88, %c0_89] : memref<8x128xf32, #tpu.memory_space<vmem>>, vector<8x128xf32>
    tpu.vector_store %arg17[%c0_88, %c0_89], %259 {strides = array<i32>} : memref<8x128xf32, #tpu.memory_space<vmem>>, vector<8x128xf32>,
    return
  }
}

</mosaic_0001>

<llo_original>
// kernel: tpu_custom_call.1
$region0: #{tpu_custom_call.1}
  #allocation0 [shape = 'u32[]', space=smem, size = 0x4, offset = 0x4, fixed_abs, tag = 'smem constant byte address 0x4 - core index']
  #allocation1 [shape = 'u32[144,128]{1,0:T(1,128)}', space=vmem, size = 0x12000, scoped, tag = 'internal scratch']
  %s0 = inlined_call_operand.vmem [shape: f32[3,4,128], index: 0, kind: input, shape index: {}]
  %s1 = inlined_call_operand.vmem [shape: f32[4,1], index: 1, kind: input, shape index: {}]
  %s2 = inlined_call_operand.vmem [shape: f32[4,1], index: 2, kind: input, shape index: {}]
  %s3 = inlined_call_operand.vmem [shape: f32[8,12], index: 3, kind: input, shape index: {}]
  %s4 = inlined_call_operand.vmem [shape: f32[8,1], index: 4, kind: input, shape index: {}]
  %s5 = inlined_call_operand.vmem [shape: f32[8,1], index: 5, kind: input, shape index: {}]
  %s6 = inlined_call_operand.vmem [shape: f32[8,1], index: 6, kind: input, shape index: {}]
  %s7 = inlined_call_operand.vmem [shape: f32[8,24], index: 7, kind: input, shape index: {}]
  %s8 = inlined_call_operand.vmem [shape: f32[8,1], index: 8, kind: input, shape index: {}]
  %s9 = inlined_call_operand.vmem [shape: f32[8,4], index: 9, kind: input, shape index: {}]
  %s10 = inlined_call_operand.vmem [shape: f32[8,1], index: 10, kind: input, shape index: {}]
  %s11 = inlined_call_operand.vmem [shape: f32[8,8], index: 11, kind: input, shape index: {}]
  %s12 = inlined_call_operand.vmem [shape: f32[8,1], index: 12, kind: input, shape index: {}]
  %s13 = inlined_call_operand.vmem [shape: f32[1,128], index: 13, kind: input, shape index: {}]
  %s14 = inlined_call_operand.vmem [shape: f32[1,128], index: 14, kind: input, shape index: {}]
  %s15 = inlined_call_operand.vmem [shape: f32[1,128], index: 15, kind: input, shape index: {}]
  %s16 = inlined_call_operand.vmem [shape: f32[2,128], index: 16, kind: input, shape index: {}]
  %s17 = inlined_call_operand.hbm [shape: f32[8,128], index: 17, kind: output, shape index: {}]
  %s18 = sld [smem:[#allocation0]]
  $region78: #{tpu_custom_call.1} parent=0
    _
  %s20 = ssub.s32 1, %s18
  %s21 = scalar_select 0, %s20, %s18
  $region1: #{tpu_custom_call.1} parent=0
    #allocation2 [shape = 'u8[4096]{0}', space=vmem, size = 0x1000, scoped, tag = 'output window, operand 0, single buffered']
    #allocation3 [shape = 's32[1]{0}', space=sflag, size = 0x4, scoped, tag = 'scoped memory for tpu_custom_call.1']
    %22 = vsyncpa [#allocation3], 0
    // Predicated region
    $region2: #{tpu_custom_call.1} parent=1 // pred_check
      _
    $region3: #{tpu_custom_call.1} parent=1 // pred_check_branch
      %24 = sbr.rel (0) target = $region5
    $region4: #{tpu_custom_call.1} parent=1 // pred_region
      _
    $region5: #{tpu_custom_call.1} parent=1 // pred_fallthru
      _
    // Predicated region
    $region6: #{tpu_custom_call.1} parent=1 // pred_check
      _
    $region7: #{tpu_custom_call.1} parent=1 // pred_check_branch
      %26 = sbr.rel (0) target = $region9
    $region8: #{tpu_custom_call.1} parent=1 // pred_region
      _
    $region9: #{tpu_custom_call.1} parent=1 // pred_fallthru
      _
    // Predicated region
    $region10: #{tpu_custom_call.1} parent=1 // pred_check
      _
    $region11: #{tpu_custom_call.1} parent=1 // pred_check_branch
      %28 = sbr.rel (0) target = $region13
    $region12: #{tpu_custom_call.1} parent=1 // pred_region
      _
    $region13: #{tpu_custom_call.1} parent=1 // pred_fallthru
      _
    // Predicated region
    $region14: #{tpu_custom_call.1} parent=1 // pred_check
      _
    $region15: #{tpu_custom_call.1} parent=1 // pred_check_branch
      %30 = sbr.rel (0) target = $region17
    $region16: #{tpu_custom_call.1} parent=1 // pred_region
      _
    $region17: #{tpu_custom_call.1} parent=1 // pred_fallthru
      _
    // Predicated region
    $region18: #{tpu_custom_call.1} parent=1 // pred_check
      _
    $region19: #{tpu_custom_call.1} parent=1 // pred_check_branch
      %32 = sbr.rel (0) target = $region21
    $region20: #{tpu_custom_call.1} parent=1 // pred_region
      _
    $region21: #{tpu_custom_call.1} parent=1 // pred_fallthru
      _
    // Predicated region
    $region22: #{tpu_custom_call.1} parent=1 // pred_check
      _
    $region23: #{tpu_custom_call.1} parent=1 // pred_check_branch
      %34 = sbr.rel (0) target = $region25
    $region24: #{tpu_custom_call.1} parent=1 // pred_region
      _
    $region25: #{tpu_custom_call.1} parent=1 // pred_fallthru
      _
    // Predicated region
    $region26: #{tpu_custom_call.1} parent=1 // pred_check
      _
    $region27: #{tpu_custom_call.1} parent=1 // pred_check_branch
      %36 = sbr.rel (0) target = $region29
    $region28: #{tpu_custom_call.1} parent=1 // pred_region
      _
    $region29: #{tpu_custom_call.1} parent=1 // pred_fallthru
      _
    // Predicated region
    $region30: #{tpu_custom_call.1} parent=1 // pred_check
      _
    $region31: #{tpu_custom_call.1} parent=1 // pred_check_branch
      %38 = sbr.rel (0) target = $region33
    $region32: #{tpu_custom_call.1} parent=1 // pred_region
      _
    $region33: #{tpu_custom_call.1} parent=1 // pred_fallthru
      _
    // Predicated region
    $region34: #{tpu_custom_call.1} parent=1 // pred_check
      _
    $region35: #{tpu_custom_call.1} parent=1 // pred_check_branch
      %40 = sbr.rel (0) target = $region37
    $region36: #{tpu_custom_call.1} parent=1 // pred_region
      _
    $region37: #{tpu_custom_call.1} parent=1 // pred_fallthru
      _
    // Predicated region
    $region38: #{tpu_custom_call.1} parent=1 // pred_check
      _
    $region39: #{tpu_custom_call.1} parent=1 // pred_check_branch
      %42 = sbr.rel (0) target = $region41
    $region40: #{tpu_custom_call.1} parent=1 // pred_region
      _
    $region41: #{tpu_custom_call.1} parent=1 // pred_fallthru
      _
    // Predicated region
    $region42: #{tpu_custom_call.1} parent=1 // pred_check
      _
    $region43: #{tpu_custom_call.1} parent=1 // pred_check_branch
      %44 = sbr.rel (0) target = $region45
    $region44: #{tpu_custom_call.1} parent=1 // pred_region
      _
    $region45: #{tpu_custom_call.1} parent=1 // pred_fallthru
      _
    // Predicated region
    $region46: #{tpu_custom_call.1} parent=1 // pred_check
      _
    $region47: #{tpu_custom_call.1} parent=1 // pred_check_branch
      %46 = sbr.rel (0) target = $region49
    $region48: #{tpu_custom_call.1} parent=1 // pred_region
      _
    $region49: #{tpu_custom_call.1} parent=1 // pred_fallthru
      _
    // Predicated region
    $region50: #{tpu_custom_call.1} parent=1 // pred_check
      _
    $region51: #{tpu_custom_call.1} parent=1 // pred_check_branch
      %48 = sbr.rel (0) target = $region53
    $region52: #{tpu_custom_call.1} parent=1 // pred_region
      _
    $region53: #{tpu_custom_call.1} parent=1 // pred_fallthru
      _
    // Predicated region
    $region54: #{tpu_custom_call.1} parent=1 // pred_check
      _
    $region55: #{tpu_custom_call.1} parent=1 // pred_check_branch
      %50 = sbr.rel (0) target = $region57
    $region56: #{tpu_custom_call.1} parent=1 // pred_region
      _
    $region57: #{tpu_custom_call.1} parent=1 // pred_fallthru
      _
    // Predicated region
    $region58: #{tpu_custom_call.1} parent=1 // pred_check
      _
    $region59: #{tpu_custom_call.1} parent=1 // pred_check_branch
      %52 = sbr.rel (0) target = $region61
    $region60: #{tpu_custom_call.1} parent=1 // pred_region
      _
    $region61: #{tpu_custom_call.1} parent=1 // pred_fallthru
      _
    // Predicated region
    $region62: #{tpu_custom_call.1} parent=1 // pred_check
      _
    $region63: #{tpu_custom_call.1} parent=1 // pred_check_branch
      %54 = sbr.rel (0) target = $region65
    $region64: #{tpu_custom_call.1} parent=1 // pred_region
      _
    $region65: #{tpu_custom_call.1} parent=1 // pred_fallthru
      _
    // Predicated region
    $region66: #{tpu_custom_call.1} parent=1 // pred_check
      _
    $region67: #{tpu_custom_call.1} parent=1 // pred_check_branch
      %56 = sbr.rel (0) target = $region69
    $region68: #{tpu_custom_call.1} parent=1 // pred_region
      _
    $region69: #{tpu_custom_call.1} parent=1 // pred_fallthru
      _
    %v57 = vld [vmem:[%s13] sm:$0x1]
    %v58 = vld [vmem:[%s14] sm:$0x1]
    %v59 = vld [vmem:[%s15] sm:$0x1]
    %v60 = vld [vmem:[%s0] sm:$0xf]
    %s61 = scalar_lea.vmem %s0, 4
    %v62 = vld [vmem:[%s61] sm:$0xf]
    %s63 = scalar_lea.vmem %s0, 8
    %v64 = vld [vmem:[%s63] sm:$0xf]
    %v65 = vld [vmem:[%s1] sm:$0xf]
    %v66 = vld [vmem:[%s2] sm:$0xf]
    %v68 = vlaneseq
    %v69 = vshrl.u32 %v68, 7
    %v70 = vsub.s32 0, %v69
    %v71 = vrot.slane %v57, %v70
    %v73 = vmul.f32 %v60, %v71
    %vm74 = vcmask 1043456
    %v75 = vsel %vm74, %v73, 0.0
    %76 = vadd.xlane.f32.xlu0 %v75
    %v77 = vpop.xlane.xlu0 %76
    %v78 = vmul.f32 %v62, %v71
    %v79 = vsel %vm74, %v78, 0.0
    %80 = vadd.xlane.f32.xlu0 %v79
    %v81 = vpop.xlane.xlu0 %80
    %v82 = vadd.f32 %v77, %v81
    %v83 = vmul.f32 %v64, %v71
    %v84 = vsel %vm74, %v83, 0.0
    %85 = vadd.xlane.f32.xlu0 %v84
    %v86 = vpop.xlane.xlu0 %85
    %v87 = vadd.f32 %v82, %v86
    %v88 = vmul.f32 %v87, 0.020833334
    %v89 = vsub.f32 %v60, %v88
    %v90 = vmul.f32 %v89, %v71
    %v91 = vmul.f32 %v90, %v90
    %v92 = vsel %vm74, %v91, 0.0
    %93 = vadd.xlane.f32.xlu0 %v92
    %v94 = vpop.xlane.xlu0 %93
    %v95 = vsub.f32 %v62, %v88
    %v96 = vmul.f32 %v95, %v71
    %v97 = vmul.f32 %v96, %v96
    %v98 = vsel %vm74, %v97, 0.0
    %99 = vadd.xlane.f32.xlu0 %v98
    %v100 = vpop.xlane.xlu0 %99
    %v101 = vadd.f32 %v94, %v100
    %v102 = vsub.f32 %v64, %v88
    %v103 = vmul.f32 %v102, %v71
    %v104 = vmul.f32 %v103, %v103
    %v105 = vsel %vm74, %v104, 0.0
    %106 = vadd.xlane.f32.xlu0 %v105
    %v107 = vpop.xlane.xlu0 %106
    %v108 = vadd.f32 %v101, %v107
    %v109 = vmul.f32 %v108, 0.020833334
    %v110 = vadd.f32 %v109, 1e-05
    %v111 = vrsqrt.pop %v110
    %v112 = vmul.f32 %v65, %v111
    %v113 = vmul.f32 %v112, %v88
    %v114 = vsub.f32 %v66, %v113
    %116 = vset.pattern.permute.xlu0 0
    %117 = vperm.xlu0 %116, %v112
    %v118 = vpop.permute.xlu0 %117
    %v120 = vmul.f32 %v60, %v118
    %122 = vset.pattern.permute.xlu0 0
    %123 = vperm.xlu0 %122, %v114
    %v124 = vpop.permute.xlu0 %123
    %v126 = vadd.f32 %v120, %v124
    %v127 = vmul.f32 %v62, %v118
    %v128 = vadd.f32 %v127, %v124
    %v129 = vmul.f32 %v64, %v118
    %v130 = vadd.f32 %v129, %v124
    %vm131 = vcmp.gt.f32.partialorder %v126, 0.0
    %v132 = vmul.f32 %v126, 0.01
    %v133 = vsel %vm131, %v126, %v132
    %vm134 = vcmp.gt.f32.partialorder %v128, 0.0
    %v135 = vmul.f32 %v128, 0.01
    %v136 = vsel %vm134, %v128, %v135
    %vm137 = vcmp.gt.f32.partialorder %v130, 0.0
    %v138 = vmul.f32 %v130, 0.01
    %v139 = vsel %vm137, %v130, %v138
    %v140 = vld [vmem:[%s3] sm:$0xff]
    %v141 = vld [vmem:[%s4] sm:$0xff]
    %142 = vrot.lane.b32.xlu0 %v139, 1
    %v143 = vpop.permute.xlu0 %142
    %v145 = vlaneseq
    %v146 = vshrl.u32 %v145, 7
    %v147 = vsub.s32 0, %v146
    %v148 = vrot.slane %v58, %v147
    %v150 = vmul.f32 %v143, %v148
    %151 = vrot.lane.b32.xlu0 %v133, 127
    %v152 = vpop.permute.xlu0 %151
    %v154 = vlaneseq
    %v155 = vshrl.u32 %v154, 7
    %v156 = vsub.s32 0, %v155
    %v157 = vrot.slane %v59, %v156
    %v159 = vmul.f32 %v152, %v157
    %v161 = vrot.slane %v133, 4
    %v163 = vsel %vm74, %v150, %v161
    %165 = vset.pattern.permute.xlu0 0
    %166 = vperm.xlu0 %165, %v141
    %v167 = vpop.permute.xlu0 %166
    %vm169 = vcmask 97280
    %v171 = vsel %vm169, %v140, 0
    %v174 = vsel %vm74, %v136, 0
    %176 = vmatprep.subr.mxu0 0.0
    %177 = vmatpush1.msra.mxu0 %v163
    %178 = vmatprep.subr.mxu0 0.0
    %179 = vmatpush1.msra.mxu0 %v174
    %180 = vmatprep.subr.mxu0 0.0
    %181 = vmatpush1.msra.mxu0 0.0
    %182 = vmatprep.subr.mxu0 0.0
    %183 = vmatpush1.msra.mxu0 0.0
    %184 = vmatprep.subr.mxu0 0.0
    %185 = vmatpush1.msra.mxu0 0.0
    %186 = vmatprep.subr.mxu0 0.0
    %187 = vmatpush1.msra.mxu0 0.0
    %188 = vmatprep.subr.mxu0 0.0
    %189 = vmatpush1.msra.mxu0 0.0
    %190 = vmatprep.subr.mxu0 0.0
    %191 = vmatpush1.msra.mxu0 0.0
    %192 = vmatprep.subr.mxu0 0.0
    %193 = vmatpush1.msra.mxu0 0.0
    %194 = vmatprep.subr.mxu0 0.0
    %195 = vmatpush1.msra.mxu0 0.0
    %196 = vmatprep.subr.mxu0 0.0
    %197 = vmatpush1.msra.mxu0 0.0
    %198 = vmatprep.subr.mxu0 0.0
    %199 = vmatpush1.msra.mxu0 0.0
    %200 = vmatprep.subr.mxu0 0.0
    %201 = vmatpush1.msra.mxu0 0.0
    %202 = vmatprep.subr.mxu0 0.0
    %203 = vmatpush1.msra.mxu0 0.0
    %204 = vmatprep.subr.mxu0 0.0
    %205 = vmatpush1.msra.mxu0 0.0
    %206 = vmatprep.subr.mxu0 0.0
    %207 = vmatpush1.msra.mxu0 0.0
    %208 = vmatprep.subr.mxu0 0.0
    %209 = vmatpush1.msra.mxu0 0.0
    %210 = vmatprep.subr.mxu0 0.0
    %211 = vmatpush1.msra.mxu0 0.0
    %212 = vmatprep.subr.mxu0 0.0
    %213 = vmatpush1.msra.mxu0 0.0
    %214 = vmatprep.subr.mxu0 0.0
    %215 = vmatpush1.msra.mxu0 0.0
    %216 = vmatprep.subr.mxu0 0.0
    %217 = vmatpush1.msra.mxu0 0.0
    %218 = vmatprep.subr.mxu0 0.0
    %219 = vmatpush1.msra.mxu0 0.0
    %220 = vmatprep.subr.mxu0 0.0
    %221 = vmatpush1.msra.mxu0 0.0
    %222 = vmatprep.subr.mxu0 0.0
    %223 = vmatpush1.msra.mxu0 0.0
    %224 = vmatprep.subr.mxu0 0.0
    %225 = vmatpush1.msra.mxu0 0.0
    %226 = vmatprep.subr.mxu0 0.0
    %227 = vmatpush1.msra.mxu0 0.0
    %228 = vmatprep.subr.mxu0 0.0
    %229 = vmatpush1.msra.mxu0 0.0
    %230 = vmatprep.subr.mxu0 0.0
    %231 = vmatpush1.msra.mxu0 0.0
    %232 = vmatprep.subr.mxu0 0.0
    %233 = vmatpush1.msra.mxu0 0.0
    %234 = vmatprep.subr.mxu0 0.0
    %235 = vmatpush1.msra.mxu0 0.0
    %236 = vmatprep.subr.mxu0 0.0
    %237 = vmatpush1.msra.mxu0 0.0
    %238 = vmatprep.subr.mxu0 0.0
    %239 = vmatpush1.msra.mxu0 0.0
    %240 = vmatprep.mubr.f32.mxu0 0.0
    %241 = vmatmul.mubr.f32.gmra.mrb[0].mxu0 %v171
    %v242 = vpop.f32.mrb[0].mxu0
    %v243 = vadd.f32 %v167, %v242
    %v244 = vpop.f32.mrb[0].mxu0
    %245 = vdwg.mxu0
    %v246 = vrot.slane %v136, 4
    %v248 = vsel %vm74, %v133, %v246
    %v250 = vsel %vm74, %v139, 0
    %252 = vmatprep.subr.mxu0 0.0
    %253 = vmatpush1.msra.mxu0 %v248
    %254 = vmatprep.subr.mxu0 0.0
    %255 = vmatpush1.msra.mxu0 %v250
    %256 = vmatprep.subr.mxu0 0.0
    %257 = vmatpush1.msra.mxu0 0.0
    %258 = vmatprep.subr.mxu0 0.0
    %259 = vmatpush1.msra.mxu0 0.0
    %260 = vmatprep.subr.mxu0 0.0
    %261 = vmatpush1.msra.mxu0 0.0
    %262 = vmatprep.subr.mxu0 0.0
    %263 = vmatpush1.msra.mxu0 0.0
    %264 = vmatprep.subr.mxu0 0.0
    %265 = vmatpush1.msra.mxu0 0.0
    %266 = vmatprep.subr.mxu0 0.0
    %267 = vmatpush1.msra.mxu0 0.0
    %268 = vmatprep.subr.mxu0 0.0
    %269 = vmatpush1.msra.mxu0 0.0
    %270 = vmatprep.subr.mxu0 0.0
    %271 = vmatpush1.msra.mxu0 0.0
    %272 = vmatprep.subr.mxu0 0.0
    %273 = vmatpush1.msra.mxu0 0.0
    %274 = vmatprep.subr.mxu0 0.0
    %275 = vmatpush1.msra.mxu0 0.0
    %276 = vmatprep.subr.mxu0 0.0
    %277 = vmatpush1.msra.mxu0 0.0
    %278 = vmatprep.subr.mxu0 0.0
    %279 = vmatpush1.msra.mxu0 0.0
    %280 = vmatprep.subr.mxu0 0.0
    %281 = vmatpush1.msra.mxu0 0.0
    %282 = vmatprep.subr.mxu0 0.0
    %283 = vmatpush1.msra.mxu0 0.0
    %284 = vmatprep.subr.mxu0 0.0
    %285 = vmatpush1.msra.mxu0 0.0
    %286 = vmatprep.subr.mxu0 0.0
    %287 = vmatpush1.msra.mxu0 0.0
    %288 = vmatprep.subr.mxu0 0.0
    %289 = vmatpush1.msra.mxu0 0.0
    %290 = vmatprep.subr.mxu0 0.0
    %291 = vmatpush1.msra.mxu0 0.0
    %292 = vmatprep.subr.mxu0 0.0
    %293 = vmatpush1.msra.mxu0 0.0
    %294 = vmatprep.subr.mxu0 0.0
    %295 = vmatpush1.msra.mxu0 0.0
    %296 = vmatprep.subr.mxu0 0.0
    %297 = vmatpush1.msra.mxu0 0.0
    %298 = vmatprep.subr.mxu0 0.0
    %299 = vmatpush1.msra.mxu0 0.0
    %300 = vmatprep.subr.mxu0 0.0
    %301 = vmatpush1.msra.mxu0 0.0
    %302 = vmatprep.subr.mxu0 0.0
    %303 = vmatpush1.msra.mxu0 0.0
    %304 = vmatprep.subr.mxu0 0.0
    %305 = vmatpush1.msra.mxu0 0.0
    %306 = vmatprep.subr.mxu0 0.0
    %307 = vmatpush1.msra.mxu0 0.0
    %308 = vmatprep.subr.mxu0 0.0
    %309 = vmatpush1.msra.mxu0 0.0
    %310 = vmatprep.subr.mxu0 0.0
    %311 = vmatpush1.msra.mxu0 0.0
    %312 = vmatprep.subr.mxu0 0.0
    %313 = vmatpush1.msra.mxu0 0.0
    %314 = vmatprep.subr.mxu0 0.0
    %315 = vmatpush1.msra.mxu0 0.0
    %316 = vmatprep.mubr.f32.mxu0 0.0
    %317 = vmatmul.mubr.f32.gmra.mrb[0].mxu0 %v171
    %v318 = vpop.f32.mrb[0].mxu0
    %v319 = vadd.f32 %v167, %v318
    %v320 = vpop.f32.mrb[0].mxu0
    %321 = vdwg.mxu0
    %v322 = vrot.slane %v139, 4
    %v324 = vsel %vm74, %v136, %v322
    %v326 = vsel %vm74, %v159, 0
    %328 = vmatprep.subr.mxu0 0.0
    %329 = vmatpush1.msra.mxu0 %v324
    %330 = vmatprep.subr.mxu0 0.0
    %331 = vmatpush1.msra.mxu0 %v326
    %332 = vmatprep.subr.mxu0 0.0
    %333 = vmatpush1.msra.mxu0 0.0
    %334 = vmatprep.subr.mxu0 0.0
    %335 = vmatpush1.msra.mxu0 0.0
    %336 = vmatprep.subr.mxu0 0.0
    %337 = vmatpush1.msra.mxu0 0.0
    %338 = vmatprep.subr.mxu0 0.0
    %339 = vmatpush1.msra.mxu0 0.0
    %340 = vmatprep.subr.mxu0 0.0
    %341 = vmatpush1.msra.mxu0 0.0
    %342 = vmatprep.subr.mxu0 0.0
    %343 = vmatpush1.msra.mxu0 0.0
    %344 = vmatprep.subr.mxu0 0.0
    %345 = vmatpush1.msra.mxu0 0.0
    %346 = vmatprep.subr.mxu0 0.0
    %347 = vmatpush1.msra.mxu0 0.0
    %348 = vmatprep.subr.mxu0 0.0
    %349 = vmatpush1.msra.mxu0 0.0
    %350 = vmatprep.subr.mxu0 0.0
    %351 = vmatpush1.msra.mxu0 0.0
    %352 = vmatprep.subr.mxu0 0.0
    %353 = vmatpush1.msra.mxu0 0.0
    %354 = vmatprep.subr.mxu0 0.0
    %355 = vmatpush1.msra.mxu0 0.0
    %356 = vmatprep.subr.mxu0 0.0
    %357 = vmatpush1.msra.mxu0 0.0
    %358 = vmatprep.subr.mxu0 0.0
    %359 = vmatpush1.msra.mxu0 0.0
    %360 = vmatprep.subr.mxu0 0.0
    %361 = vmatpush1.msra.mxu0 0.0
    %362 = vmatprep.subr.mxu0 0.0
    %363 = vmatpush1.msra.mxu0 0.0
    %364 = vmatprep.subr.mxu0 0.0
    %365 = vmatpush1.msra.mxu0 0.0
    %366 = vmatprep.subr.mxu0 0.0
    %367 = vmatpush1.msra.mxu0 0.0
    %368 = vmatprep.subr.mxu0 0.0
    %369 = vmatpush1.msra.mxu0 0.0
    %370 = vmatprep.subr.mxu0 0.0
    %371 = vmatpush1.msra.mxu0 0.0
    %372 = vmatprep.subr.mxu0 0.0
    %373 = vmatpush1.msra.mxu0 0.0
    %374 = vmatprep.subr.mxu0 0.0
    %375 = vmatpush1.msra.mxu0 0.0
    %376 = vmatprep.subr.mxu0 0.0
    %377 = vmatpush1.msra.mxu0 0.0
    %378 = vmatprep.subr.mxu0 0.0
    %379 = vmatpush1.msra.mxu0 0.0
    %380 = vmatprep.subr.mxu0 0.0
    %381 = vmatpush1.msra.mxu0 0.0
    %382 = vmatprep.subr.mxu0 0.0
    %383 = vmatpush1.msra.mxu0 0.0
    %384 = vmatprep.subr.mxu0 0.0
    %385 = vmatpush1.msra.mxu0 0.0
    %386 = vmatprep.subr.mxu0 0.0
    %387 = vmatpush1.msra.mxu0 0.0
    %388 = vmatprep.subr.mxu0 0.0
    %389 = vmatpush1.msra.mxu0 0.0
    %390 = vmatprep.subr.mxu0 0.0
    %391 = vmatpush1.msra.mxu0 0.0
    %392 = vmatprep.mubr.f32.mxu0 0.0
    %393 = vmatmul.mubr.f32.gmra.mrb[0].mxu0 %v171
    %v394 = vpop.f32.mrb[0].mxu0
    %v395 = vadd.f32 %v167, %v394
    %v396 = vpop.f32.mrb[0].mxu0
    %397 = vdwg.mxu0
    %v398 = vld [vmem:[%s5] sm:$0xff]
    %v399 = vld [vmem:[%s6] sm:$0xff]
    %v400 = vmul.f32 %v243, %v71
    %401 = vadd.xlane.f32.xlu0 %v400
    %v402 = vpop.xlane.xlu0 %401
    %v403 = vmul.f32 %v319, %v71
    %404 = vadd.xlane.f32.xlu0 %v403
    %v405 = vpop.xlane.xlu0 %404
    %v406 = vadd.f32 %v402, %v405
    %v407 = vmul.f32 %v395, %v71
    %408 = vadd.xlane.f32.xlu0 %v407
    %v409 = vpop.xlane.xlu0 %408
    %v410 = vadd.f32 %v406, %v409
    %v411 = vmul.f32 %v410, 0.020833334
    %v412 = vsub.f32 %v243, %v411
    %v413 = vmul.f32 %v412, %v71
    %v414 = vmul.f32 %v413, %v413
    %415 = vadd.xlane.f32.xlu0 %v414
    %v416 = vpop.xlane.xlu0 %415
    %v417 = vsub.f32 %v319, %v411
    %v418 = vmul.f32 %v417, %v71
    %v419 = vmul.f32 %v418, %v418
    %420 = vadd.xlane.f32.xlu0 %v419
    %v421 = vpop.xlane.xlu0 %420
    %v422 = vadd.f32 %v416, %v421
    %v423 = vsub.f32 %v395, %v411
    %v424 = vmul.f32 %v423, %v71
    %v425 = vmul.f32 %v424, %v424
    %426 = vadd.xlane.f32.xlu0 %v425
    %v427 = vpop.xlane.xlu0 %426
    %v428 = vadd.f32 %v422, %v427
    %v429 = vmul.f32 %v428, 0.020833334
    %v430 = vadd.f32 %v429, 1e-05
    %v431 = vrsqrt.pop %v430
    %v432 = vmul.f32 %v398, %v431
    %v433 = vmul.f32 %v432, %v411
    %v434 = vsub.f32 %v399, %v433
    %436 = vset.pattern.permute.xlu0 0
    %437 = vperm.xlu0 %436, %v432
    %v438 = vpop.permute.xlu0 %437
    %v440 = vmul.f32 %v243, %v438
    %442 = vset.pattern.permute.xlu0 0
    %443 = vperm.xlu0 %442, %v434
    %v444 = vpop.permute.xlu0 %443
    %v446 = vadd.f32 %v440, %v444
    %v447 = vmul.f32 %v319, %v438
    %v448 = vadd.f32 %v447, %v444
    %v449 = vmul.f32 %v395, %v438
    %v450 = vadd.f32 %v449, %v444
    %v451 = vld [vmem:[%s7] sm:$0xff]
    %v452 = vld [vmem:[%s8] sm:$0xff]
    %453 = vrot.lane.b32.xlu0 %v450, 1
    %v454 = vpop.permute.xlu0 %453
    %v455 = vmul.f32 %v454, %v148
    %456 = vrot.lane.b32.xlu0 %v446, 127
    %v457 = vpop.permute.xlu0 %456
    %v458 = vmul.f32 %v457, %v157
    %460 = vset.pattern.permute.xlu0 0
    %461 = vperm.xlu0 %460, %v452
    %v462 = vpop.permute.xlu0 %461
    %vm464 = vcmask 195584
    %v466 = vsel %vm464, %v451, 0
    %468 = vmatprep.subr.mxu0 0.0
    %469 = vmatpush1.msra.mxu0 %v455
    %470 = vmatprep.subr.mxu0 0.0
    %471 = vmatpush1.msra.mxu0 %v446
    %472 = vmatprep.subr.mxu0 0.0
    %473 = vmatpush1.msra.mxu0 %v448
    %474 = vmatprep.subr.mxu0 0.0
    %475 = vmatpush1.msra.mxu0 0.0
    %476 = vmatprep.subr.mxu0 0.0
    %477 = vmatpush1.msra.mxu0 0.0
    %478 = vmatprep.subr.mxu0 0.0
    %479 = vmatpush1.msra.mxu0 0.0
    %480 = vmatprep.subr.mxu0 0.0
    %481 = vmatpush1.msra.mxu0 0.0
    %482 = vmatprep.subr.mxu0 0.0
    %483 = vmatpush1.msra.mxu0 0.0
    %484 = vmatprep.subr.mxu0 0.0
    %485 = vmatpush1.msra.mxu0 0.0
    %486 = vmatprep.subr.mxu0 0.0
    %487 = vmatpush1.msra.mxu0 0.0
    %488 = vmatprep.subr.mxu0 0.0
    %489 = vmatpush1.msra.mxu0 0.0
    %490 = vmatprep.subr.mxu0 0.0
    %491 = vmatpush1.msra.mxu0 0.0
    %492 = vmatprep.subr.mxu0 0.0
    %493 = vmatpush1.msra.mxu0 0.0
    %494 = vmatprep.subr.mxu0 0.0
    %495 = vmatpush1.msra.mxu0 0.0
    %496 = vmatprep.subr.mxu0 0.0
    %497 = vmatpush1.msra.mxu0 0.0
    %498 = vmatprep.subr.mxu0 0.0
    %499 = vmatpush1.msra.mxu0 0.0
    %500 = vmatprep.subr.mxu0 0.0
    %501 = vmatpush1.msra.mxu0 0.0
    %502 = vmatprep.subr.mxu0 0.0
    %503 = vmatpush1.msra.mxu0 0.0
    %504 = vmatprep.subr.mxu0 0.0
    %505 = vmatpush1.msra.mxu0 0.0
    %506 = vmatprep.subr.mxu0 0.0
    %507 = vmatpush1.msra.mxu0 0.0
    %508 = vmatprep.subr.mxu0 0.0
    %509 = vmatpush1.msra.mxu0 0.0
    %510 = vmatprep.subr.mxu0 0.0
    %511 = vmatpush1.msra.mxu0 0.0
    %512 = vmatprep.subr.mxu0 0.0
    %513 = vmatpush1.msra.mxu0 0.0
    %514 = vmatprep.subr.mxu0 0.0
    %515 = vmatpush1.msra.mxu0 0.0
    %516 = vmatprep.subr.mxu0 0.0
    %517 = vmatpush1.msra.mxu0 0.0
    %518 = vmatprep.subr.mxu0 0.0
    %519 = vmatpush1.msra.mxu0 0.0
    %520 = vmatprep.subr.mxu0 0.0
    %521 = vmatpush1.msra.mxu0 0.0
    %522 = vmatprep.subr.mxu0 0.0
    %523 = vmatpush1.msra.mxu0 0.0
    %524 = vmatprep.subr.mxu0 0.0
    %525 = vmatpush1.msra.mxu0 0.0
    %526 = vmatprep.subr.mxu0 0.0
    %527 = vmatpush1.msra.mxu0 0.0
    %528 = vmatprep.subr.mxu0 0.0
    %529 = vmatpush1.msra.mxu0 0.0
    %530 = vmatprep.subr.mxu0 0.0
    %531 = vmatpush1.msra.mxu0 0.0
    %532 = vmatprep.mubr.f32.mxu0 0.0
    %533 = vmatmul.mubr.f32.gmra.mrb[0].mxu0 %v466
    %v534 = vpop.f32.mrb[0].mxu0
    %v535 = vadd.f32 %v462, %v534
    %v536 = vpop.f32.mrb[0].mxu0
    %537 = vdwg.mxu0
    %538 = vmatprep.subr.mxu0 0.0
    %539 = vmatpush1.msra.mxu0 %v446
    %540 = vmatprep.subr.mxu0 0.0
    %541 = vmatpush1.msra.mxu0 %v448
    %542 = vmatprep.subr.mxu0 0.0
    %543 = vmatpush1.msra.mxu0 %v450
    %544 = vmatprep.subr.mxu0 0.0
    %545 = vmatpush1.msra.mxu0 0.0
    %546 = vmatprep.subr.mxu0 0.0
    %547 = vmatpush1.msra.mxu0 0.0
    %548 = vmatprep.subr.mxu0 0.0
    %549 = vmatpush1.msra.mxu0 0.0
    %550 = vmatprep.subr.mxu0 0.0
    %551 = vmatpush1.msra.mxu0 0.0
    %552 = vmatprep.subr.mxu0 0.0
    %553 = vmatpush1.msra.mxu0 0.0
    %554 = vmatprep.subr.mxu0 0.0
    %555 = vmatpush1.msra.mxu0 0.0
    %556 = vmatprep.subr.mxu0 0.0
    %557 = vmatpush1.msra.mxu0 0.0
    %558 = vmatprep.subr.mxu0 0.0
    %559 = vmatpush1.msra.mxu0 0.0
    %560 = vmatprep.subr.mxu0 0.0
    %561 = vmatpush1.msra.mxu0 0.0
    %562 = vmatprep.subr.mxu0 0.0
    %563 = vmatpush1.msra.mxu0 0.0
    %564 = vmatprep.subr.mxu0 0.0
    %565 = vmatpush1.msra.mxu0 0.0
    %566 = vmatprep.subr.mxu0 0.0
    %567 = vmatpush1.msra.mxu0 0.0
    %568 = vmatprep.subr.mxu0 0.0
    %569 = vmatpush1.msra.mxu0 0.0
    %570 = vmatprep.subr.mxu0 0.0
    %571 = vmatpush1.msra.mxu0 0.0
    %572 = vmatprep.subr.mxu0 0.0
    %573 = vmatpush1.msra.mxu0 0.0
    %574 = vmatprep.subr.mxu0 0.0
    %575 = vmatpush1.msra.mxu0 0.0
    %576 = vmatprep.subr.mxu0 0.0
    %577 = vmatpush1.msra.mxu0 0.0
    %578 = vmatprep.subr.mxu0 0.0
    %579 = vmatpush1.msra.mxu0 0.0
    %580 = vmatprep.subr.mxu0 0.0
    %581 = vmatpush1.msra.mxu0 0.0
    %582 = vmatprep.subr.mxu0 0.0
    %583 = vmatpush1.msra.mxu0 0.0
    %584 = vmatprep.subr.mxu0 0.0
    %585 = vmatpush1.msra.mxu0 0.0
    %586 = vmatprep.subr.mxu0 0.0
    %587 = vmatpush1.msra.mxu0 0.0
    %588 = vmatprep.subr.mxu0 0.0
    %589 = vmatpush1.msra.mxu0 0.0
    %590 = vmatprep.subr.mxu0 0.0
    %591 = vmatpush1.msra.mxu0 0.0
    %592 = vmatprep.subr.mxu0 0.0
    %593 = vmatpush1.msra.mxu0 0.0
    %594 = vmatprep.subr.mxu0 0.0
    %595 = vmatpush1.msra.mxu0 0.0
    %596 = vmatprep.subr.mxu0 0.0
    %597 = vmatpush1.msra.mxu0 0.0
    %598 = vmatprep.subr.mxu0 0.0
    %599 = vmatpush1.msra.mxu0 0.0
    %600 = vmatprep.subr.mxu0 0.0
    %601 = vmatpush1.msra.mxu0 0.0
    %602 = vmatprep.mubr.f32.mxu0 0.0
    %603 = vmatmul.mubr.f32.gmra.mrb[0].mxu0 %v466
    %v604 = vpop.f32.mrb[0].mxu0
    %v605 = vadd.f32 %v462, %v604
    %v606 = vpop.f32.mrb[0].mxu0
    %607 = vdwg.mxu0
    %608 = vmatprep.subr.mxu0 0.0
    %609 = vmatpush1.msra.mxu0 %v448
    %610 = vmatprep.subr.mxu0 0.0
    %611 = vmatpush1.msra.mxu0 %v450
    %612 = vmatprep.subr.mxu0 0.0
    %613 = vmatpush1.msra.mxu0 %v458
    %614 = vmatprep.subr.mxu0 0.0
    %615 = vmatpush1.msra.mxu0 0.0
    %616 = vmatprep.subr.mxu0 0.0
    %617 = vmatpush1.msra.mxu0 0.0
    %618 = vmatprep.subr.mxu0 0.0
    %619 = vmatpush1.msra.mxu0 0.0
    %620 = vmatprep.subr.mxu0 0.0
    %621 = vmatpush1.msra.mxu0 0.0
    %622 = vmatprep.subr.mxu0 0.0
    %623 = vmatpush1.msra.mxu0 0.0
    %624 = vmatprep.subr.mxu0 0.0
    %625 = vmatpush1.msra.mxu0 0.0
    %626 = vmatprep.subr.mxu0 0.0
    %627 = vmatpush1.msra.mxu0 0.0
    %628 = vmatprep.subr.mxu0 0.0
    %629 = vmatpush1.msra.mxu0 0.0
    %630 = vmatprep.subr.mxu0 0.0
    %631 = vmatpush1.msra.mxu0 0.0
    %632 = vmatprep.subr.mxu0 0.0
    %633 = vmatpush1.msra.mxu0 0.0
    %634 = vmatprep.subr.mxu0 0.0
    %635 = vmatpush1.msra.mxu0 0.0
    %636 = vmatprep.subr.mxu0 0.0
    %637 = vmatpush1.msra.mxu0 0.0
    %638 = vmatprep.subr.mxu0 0.0
    %639 = vmatpush1.msra.mxu0 0.0
    %640 = vmatprep.subr.mxu0 0.0
    %641 = vmatpush1.msra.mxu0 0.0
    %642 = vmatprep.subr.mxu0 0.0
    %643 = vmatpush1.msra.mxu0 0.0
    %644 = vmatprep.subr.mxu0 0.0
    %645 = vmatpush1.msra.mxu0 0.0
    %646 = vmatprep.subr.mxu0 0.0
    %647 = vmatpush1.msra.mxu0 0.0
    %648 = vmatprep.subr.mxu0 0.0
    %649 = vmatpush1.msra.mxu0 0.0
    %650 = vmatprep.subr.mxu0 0.0
    %651 = vmatpush1.msra.mxu0 0.0
    %652 = vmatprep.subr.mxu0 0.0
    %653 = vmatpush1.msra.mxu0 0.0
    %654 = vmatprep.subr.mxu0 0.0
    %655 = vmatpush1.msra.mxu0 0.0
    %656 = vmatprep.subr.mxu0 0.0
    %657 = vmatpush1.msra.mxu0 0.0
    %658 = vmatprep.subr.mxu0 0.0
    %659 = vmatpush1.msra.mxu0 0.0
    %660 = vmatprep.subr.mxu0 0.0
    %661 = vmatpush1.msra.mxu0 0.0
    %662 = vmatprep.subr.mxu0 0.0
    %663 = vmatpush1.msra.mxu0 0.0
    %664 = vmatprep.subr.mxu0 0.0
    %665 = vmatpush1.msra.mxu0 0.0
    %666 = vmatprep.subr.mxu0 0.0
    %667 = vmatpush1.msra.mxu0 0.0
    %668 = vmatprep.subr.mxu0 0.0
    %669 = vmatpush1.msra.mxu0 0.0
    %670 = vmatprep.subr.mxu0 0.0
    %671 = vmatpush1.msra.mxu0 0.0
    %672 = vmatprep.mubr.f32.mxu0 0.0
    %673 = vmatmul.mubr.f32.gmra.mrb[0].mxu0 %v466
    %v674 = vpop.f32.mrb[0].mxu0
    %v675 = vadd.f32 %v462, %v674
    %v676 = vpop.f32.mrb[0].mxu0
    %677 = vdwg.mxu0
    %vm678 = vcmp.gt.f32.partialorder %v535, 0.0
    %v679 = vmul.f32 %v535, 0.01
    %v680 = vsel %vm678, %v535, %v679
    %vm681 = vcmp.gt.f32.partialorder %v605, 0.0
    %v682 = vmul.f32 %v605, 0.01
    %v683 = vsel %vm681, %v605, %v682
    %vm684 = vcmp.gt.f32.partialorder %v675, 0.0
    %v685 = vmul.f32 %v675, 0.01
    %v686 = vsel %vm684, %v675, %v685
    %v687 = vld [vmem:[%s9] sm:$0xff]
    %v688 = vld [vmem:[%s10] sm:$0xff]
    %vm689 = vcmask 31744
    %v691 = vsel %vm689, %v687, 0
    %v694 = vsel %vm74, %v60, 0
    %696 = vmatprep.subr.mxu0 0.0
    %697 = vmatpush1.msra.mxu0 %v694
    %698 = vmatprep.subr.mxu0 0.0
    %699 = vmatpush1.msra.mxu0 0.0
    %700 = vmatprep.subr.mxu0 0.0
    %701 = vmatpush1.msra.mxu0 0.0
    %702 = vmatprep.subr.mxu0 0.0
    %703 = vmatpush1.msra.mxu0 0.0
    %704 = vmatprep.subr.mxu0 0.0
    %705 = vmatpush1.msra.mxu0 0.0
    %706 = vmatprep.subr.mxu0 0.0
    %707 = vmatpush1.msra.mxu0 0.0
    %708 = vmatprep.subr.mxu0 0.0
    %709 = vmatpush1.msra.mxu0 0.0
    %710 = vmatprep.subr.mxu0 0.0
    %711 = vmatpush1.msra.mxu0 0.0
    %712 = vmatprep.subr.mxu0 0.0
    %713 = vmatpush1.msra.mxu0 0.0
    %714 = vmatprep.subr.mxu0 0.0
    %715 = vmatpush1.msra.mxu0 0.0
    %716 = vmatprep.subr.mxu0 0.0
    %717 = vmatpush1.msra.mxu0 0.0
    %718 = vmatprep.subr.mxu0 0.0
    %719 = vmatpush1.msra.mxu0 0.0
    %720 = vmatprep.subr.mxu0 0.0
    %721 = vmatpush1.msra.mxu0 0.0
    %722 = vmatprep.subr.mxu0 0.0
    %723 = vmatpush1.msra.mxu0 0.0
    %724 = vmatprep.subr.mxu0 0.0
    %725 = vmatpush1.msra.mxu0 0.0
    %726 = vmatprep.subr.mxu0 0.0
    %727 = vmatpush1.msra.mxu0 0.0
    %728 = vmatprep.subr.mxu0 0.0
    %729 = vmatpush1.msra.mxu0 0.0
    %730 = vmatprep.subr.mxu0 0.0
    %731 = vmatpush1.msra.mxu0 0.0
    %732 = vmatprep.subr.mxu0 0.0
    %733 = vmatpush1.msra.mxu0 0.0
    %734 = vmatprep.subr.mxu0 0.0
    %735 = vmatpush1.msra.mxu0 0.0
    %736 = vmatprep.subr.mxu0 0.0
    %737 = vmatpush1.msra.mxu0 0.0
    %738 = vmatprep.subr.mxu0 0.0
    %739 = vmatpush1.msra.mxu0 0.0
    %740 = vmatprep.subr.mxu0 0.0
    %741 = vmatpush1.msra.mxu0 0.0
    %742 = vmatprep.subr.mxu0 0.0
    %743 = vmatpush1.msra.mxu0 0.0
    %744 = vmatprep.subr.mxu0 0.0
    %745 = vmatpush1.msra.mxu0 0.0
    %746 = vmatprep.subr.mxu0 0.0
    %747 = vmatpush1.msra.mxu0 0.0
    %748 = vmatprep.subr.mxu0 0.0
    %749 = vmatpush1.msra.mxu0 0.0
    %750 = vmatprep.subr.mxu0 0.0
    %751 = vmatpush1.msra.mxu0 0.0
    %752 = vmatprep.subr.mxu0 0.0
    %753 = vmatpush1.msra.mxu0 0.0
    %754 = vmatprep.subr.mxu0 0.0
    %755 = vmatpush1.msra.mxu0 0.0
    %756 = vmatprep.subr.mxu0 0.0
    %757 = vmatpush1.msra.mxu0 0.0
    %758 = vmatprep.subr.mxu0 0.0
    %759 = vmatpush1.msra.mxu0 0.0
    %760 = vmatprep.mubr.f32.mxu0 0.0
    %761 = vmatmul.mubr.f32.gmra.mrb[0].mxu0 %v691
    %v762 = vpop.f32.mrb[0].mxu0
    %v763 = vadd.f32 0.0, %v762
    %v764 = vpop.f32.mrb[0].mxu0
    %765 = vdwg.mxu0
    %v766 = vadd.f32 %v680, %v763
    %768 = vset.pattern.permute.xlu0 0
    %769 = vperm.xlu0 %768, %v688
    %v770 = vpop.permute.xlu0 %769
    %v772 = vadd.f32 %v766, %v770
    %v774 = vsel %vm74, %v62, 0
    %776 = vmatprep.subr.mxu0 0.0
    %777 = vmatpush1.msra.mxu0 %v774
    %778 = vmatprep.subr.mxu0 0.0
    %779 = vmatpush1.msra.mxu0 0.0
    %780 = vmatprep.subr.mxu0 0.0
    %781 = vmatpush1.msra.mxu0 0.0
    %782 = vmatprep.subr.mxu0 0.0
    %783 = vmatpush1.msra.mxu0 0.0
    %784 = vmatprep.subr.mxu0 0.0
    %785 = vmatpush1.msra.mxu0 0.0
    %786 = vmatprep.subr.mxu0 0.0
    %787 = vmatpush1.msra.mxu0 0.0
    %788 = vmatprep.subr.mxu0 0.0
    %789 = vmatpush1.msra.mxu0 0.0
    %790 = vmatprep.subr.mxu0 0.0
    %791 = vmatpush1.msra.mxu0 0.0
    %792 = vmatprep.subr.mxu0 0.0
    %793 = vmatpush1.msra.mxu0 0.0
    %794 = vmatprep.subr.mxu0 0.0
    %795 = vmatpush1.msra.mxu0 0.0
    %796 = vmatprep.subr.mxu0 0.0
    %797 = vmatpush1.msra.mxu0 0.0
    %798 = vmatprep.subr.mxu0 0.0
    %799 = vmatpush1.msra.mxu0 0.0
    %800 = vmatprep.subr.mxu0 0.0
    %801 = vmatpush1.msra.mxu0 0.0
    %802 = vmatprep.subr.mxu0 0.0
    %803 = vmatpush1.msra.mxu0 0.0
    %804 = vmatprep.subr.mxu0 0.0
    %805 = vmatpush1.msra.mxu0 0.0
    %806 = vmatprep.subr.mxu0 0.0
    %807 = vmatpush1.msra.mxu0 0.0
    %808 = vmatprep.subr.mxu0 0.0
    %809 = vmatpush1.msra.mxu0 0.0
    %810 = vmatprep.subr.mxu0 0.0
    %811 = vmatpush1.msra.mxu0 0.0
    %812 = vmatprep.subr.mxu0 0.0
    %813 = vmatpush1.msra.mxu0 0.0
    %814 = vmatprep.subr.mxu0 0.0
    %815 = vmatpush1.msra.mxu0 0.0
    %816 = vmatprep.subr.mxu0 0.0
    %817 = vmatpush1.msra.mxu0 0.0
    %818 = vmatprep.subr.mxu0 0.0
    %819 = vmatpush1.msra.mxu0 0.0
    %820 = vmatprep.subr.mxu0 0.0
    %821 = vmatpush1.msra.mxu0 0.0
    %822 = vmatprep.subr.mxu0 0.0
    %823 = vmatpush1.msra.mxu0 0.0
    %824 = vmatprep.subr.mxu0 0.0
    %825 = vmatpush1.msra.mxu0 0.0
    %826 = vmatprep.subr.mxu0 0.0
    %827 = vmatpush1.msra.mxu0 0.0
    %828 = vmatprep.subr.mxu0 0.0
    %829 = vmatpush1.msra.mxu0 0.0
    %830 = vmatprep.subr.mxu0 0.0
    %831 = vmatpush1.msra.mxu0 0.0
    %832 = vmatprep.subr.mxu0 0.0
    %833 = vmatpush1.msra.mxu0 0.0
    %834 = vmatprep.subr.mxu0 0.0
    %835 = vmatpush1.msra.mxu0 0.0
    %836 = vmatprep.subr.mxu0 0.0
    %837 = vmatpush1.msra.mxu0 0.0
    %838 = vmatprep.subr.mxu0 0.0
    %839 = vmatpush1.msra.mxu0 0.0
    %840 = vmatprep.mubr.f32.mxu0 0.0
    %841 = vmatmul.mubr.f32.gmra.mrb[0].mxu0 %v691
    %v842 = vpop.f32.mrb[0].mxu0
    %v843 = vadd.f32 0.0, %v842
    %v844 = vpop.f32.mrb[0].mxu0
    %845 = vdwg.mxu0
    %v846 = vadd.f32 %v683, %v843
    %v847 = vadd.f32 %v846, %v770
    %v849 = vsel %vm74, %v64, 0
    %851 = vmatprep.subr.mxu0 0.0
    %852 = vmatpush1.msra.mxu0 %v849
    %853 = vmatprep.subr.mxu0 0.0
    %854 = vmatpush1.msra.mxu0 0.0
    %855 = vmatprep.subr.mxu0 0.0
    %856 = vmatpush1.msra.mxu0 0.0
    %857 = vmatprep.subr.mxu0 0.0
    %858 = vmatpush1.msra.mxu0 0.0
    %859 = vmatprep.subr.mxu0 0.0
    %860 = vmatpush1.msra.mxu0 0.0
    %861 = vmatprep.subr.mxu0 0.0
    %862 = vmatpush1.msra.mxu0 0.0
    %863 = vmatprep.subr.mxu0 0.0
    %864 = vmatpush1.msra.mxu0 0.0
    %865 = vmatprep.subr.mxu0 0.0
    %866 = vmatpush1.msra.mxu0 0.0
    %867 = vmatprep.subr.mxu0 0.0
    %868 = vmatpush1.msra.mxu0 0.0
    %869 = vmatprep.subr.mxu0 0.0
    %870 = vmatpush1.msra.mxu0 0.0
    %871 = vmatprep.subr.mxu0 0.0
    %872 = vmatpush1.msra.mxu0 0.0
    %873 = vmatprep.subr.mxu0 0.0
    %874 = vmatpush1.msra.mxu0 0.0
    %875 = vmatprep.subr.mxu0 0.0
    %876 = vmatpush1.msra.mxu0 0.0
    %877 = vmatprep.subr.mxu0 0.0
    %878 = vmatpush1.msra.mxu0 0.0
    %879 = vmatprep.subr.mxu0 0.0
    %880 = vmatpush1.msra.mxu0 0.0
    %881 = vmatprep.subr.mxu0 0.0
    %882 = vmatpush1.msra.mxu0 0.0
    %883 = vmatprep.subr.mxu0 0.0
    %884 = vmatpush1.msra.mxu0 0.0
    %885 = vmatprep.subr.mxu0 0.0
    %886 = vmatpush1.msra.mxu0 0.0
    %887 = vmatprep.subr.mxu0 0.0
    %888 = vmatpush1.msra.mxu0 0.0
    %889 = vmatprep.subr.mxu0 0.0
    %890 = vmatpush1.msra.mxu0 0.0
    %891 = vmatprep.subr.mxu0 0.0
    %892 = vmatpush1.msra.mxu0 0.0
    %893 = vmatprep.subr.mxu0 0.0
    %894 = vmatpush1.msra.mxu0 0.0
    %895 = vmatprep.subr.mxu0 0.0
    %896 = vmatpush1.msra.mxu0 0.0
    %897 = vmatprep.subr.mxu0 0.0
    %898 = vmatpush1.msra.mxu0 0.0
    %899 = vmatprep.subr.mxu0 0.0
    %900 = vmatpush1.msra.mxu0 0.0
    %901 = vmatprep.subr.mxu0 0.0
    %902 = vmatpush1.msra.mxu0 0.0
    %903 = vmatprep.subr.mxu0 0.0
    %904 = vmatpush1.msra.mxu0 0.0
    %905 = vmatprep.subr.mxu0 0.0
    %906 = vmatpush1.msra.mxu0 0.0
    %907 = vmatprep.subr.mxu0 0.0
    %908 = vmatpush1.msra.mxu0 0.0
    %909 = vmatprep.subr.mxu0 0.0
    %910 = vmatpush1.msra.mxu0 0.0
    %911 = vmatprep.subr.mxu0 0.0
    %912 = vmatpush1.msra.mxu0 0.0
    %913 = vmatprep.subr.mxu0 0.0
    %914 = vmatpush1.msra.mxu0 0.0
    %915 = vmatprep.mubr.f32.mxu0 0.0
    %916 = vmatmul.mubr.f32.gmra.mrb[0].mxu0 %v691
    %v917 = vpop.f32.mrb[0].mxu0
    %v918 = vadd.f32 0.0, %v917
    %v919 = vpop.f32.mrb[0].mxu0
    %920 = vdwg.mxu0
    %v921 = vadd.f32 %v686, %v918
    %v922 = vadd.f32 %v921, %v770
    %v923 = vmax.f32 %v772, %v847
    %v924 = vmax.f32 %v923, %v922
    %v925 = vld [vmem:[%s11] sm:$0xff]
    %v926 = vld [vmem:[%s12] sm:$0xff]
    %v927 = vld [vmem:[%s16] sm:$0x3]
    %v928 = vlaneseq
    %v929 = vshrl.u32 %v928, 7
    %v930 = vsub.s32 0, %v929
    %v931 = vrot.slane %v927, %v930
    %v932 = vmul.f32 %v924, %v931
    %933 = vadd.xlane.f32.xlu0 %v932
    %v934 = vpop.xlane.xlu0 %933
    %v935 = vmul.f32 %v934, 0.125
    %vm936 = vcmask 64512
    %v938 = vsel %vm936, %v925, 0
    %940 = vmatprep.subr.mxu0 0.0
    %941 = vmatpush1.msra.mxu0 %v935
    %942 = vmatprep.subr.mxu0 0.0
    %943 = vmatpush1.msra.mxu0 0.0
    %944 = vmatprep.subr.mxu0 0.0
    %945 = vmatpush1.msra.mxu0 0.0
    %946 = vmatprep.subr.mxu0 0.0
    %947 = vmatpush1.msra.mxu0 0.0
    %948 = vmatprep.subr.mxu0 0.0
    %949 = vmatpush1.msra.mxu0 0.0
    %950 = vmatprep.subr.mxu0 0.0
    %951 = vmatpush1.msra.mxu0 0.0
    %952 = vmatprep.subr.mxu0 0.0
    %953 = vmatpush1.msra.mxu0 0.0
    %954 = vmatprep.subr.mxu0 0.0
    %955 = vmatpush1.msra.mxu0 0.0
    %956 = vmatprep.subr.mxu0 0.0
    %957 = vmatpush1.msra.mxu0 0.0
    %958 = vmatprep.subr.mxu0 0.0
    %959 = vmatpush1.msra.mxu0 0.0
    %960 = vmatprep.subr.mxu0 0.0
    %961 = vmatpush1.msra.mxu0 0.0
    %962 = vmatprep.subr.mxu0 0.0
    %963 = vmatpush1.msra.mxu0 0.0
    %964 = vmatprep.subr.mxu0 0.0
    %965 = vmatpush1.msra.mxu0 0.0
    %966 = vmatprep.subr.mxu0 0.0
    %967 = vmatpush1.msra.mxu0 0.0
    %968 = vmatprep.subr.mxu0 0.0
    %969 = vmatpush1.msra.mxu0 0.0
    %970 = vmatprep.subr.mxu0 0.0
    %971 = vmatpush1.msra.mxu0 0.0
    %972 = vmatprep.subr.mxu0 0.0
    %973 = vmatpush1.msra.mxu0 0.0
    %974 = vmatprep.subr.mxu0 0.0
    %975 = vmatpush1.msra.mxu0 0.0
    %976 = vmatprep.subr.mxu0 0.0
    %977 = vmatpush1.msra.mxu0 0.0
    %978 = vmatprep.subr.mxu0 0.0
    %979 = vmatpush1.msra.mxu0 0.0
    %980 = vmatprep.subr.mxu0 0.0
    %981 = vmatpush1.msra.mxu0 0.0
    %982 = vmatprep.subr.mxu0 0.0
    %983 = vmatpush1.msra.mxu0 0.0
    %984 = vmatprep.subr.mxu0 0.0
    %985 = vmatpush1.msra.mxu0 0.0
    %986 = vmatprep.subr.mxu0 0.0
    %987 = vmatpush1.msra.mxu0 0.0
    %988 = vmatprep.subr.mxu0 0.0
    %989 = vmatpush1.msra.mxu0 0.0
    %990 = vmatprep.subr.mxu0 0.0
    %991 = vmatpush1.msra.mxu0 0.0
    %992 = vmatprep.subr.mxu0 0.0
    %993 = vmatpush1.msra.mxu0 0.0
    %994 = vmatprep.subr.mxu0 0.0
    %995 = vmatpush1.msra.mxu0 0.0
    %996 = vmatprep.subr.mxu0 0.0
    %997 = vmatpush1.msra.mxu0 0.0
    %998 = vmatprep.subr.mxu0 0.0
    %999 = vmatpush1.msra.mxu0 0.0
    %1000 = vmatprep.subr.mxu0 0.0
    %1001 = vmatpush1.msra.mxu0 0.0
    %1002 = vmatprep.subr.mxu0 0.0
    %1003 = vmatpush1.msra.mxu0 0.0
    %1004 = vmatprep.mubr.f32.mxu0 0.0
    %1005 = vmatmul.mubr.f32.gmra.mrb[0].mxu0 %v938
    %v1006 = vpop.f32.mrb[0].mxu0
    %v1007 = vadd.f32 %v926, %v1006
    %v1008 = vpop.f32.mrb[0].mxu0
    %1009 = vdwg.mxu0
    %v1010 = vxor.u32 %v1007, 2147483648
    %v1011 = vmul.f32 %v1010, 1.442695
    %v1012 = vpow.pop %v1011
    %v1013 = vadd.f32 %v1012, 1.0
    %v1014 = vrcp.pop %v1013
    %v1015 = vmul.f32 1.0, %v1014
    %1017 = vset.pattern.permute.xlu0 0
    %1018 = vperm.xlu0 %1017, %v1015
    %v1019 = vpop.permute.xlu0 %1018
    %v1021 = vmul.f32 %v1019, %v931
    %v1022 = vadd.f32 %v1021, 0.0
    %v1023 = vlaneseq
    %v1024 = vshrl.u32 %v1023, 7
    %v1025 = vsub.s32 1, %v1024
    %v1026 = vrot.slane %v927, %v1025
    %v1027 = vmul.f32 %v924, %v1026
    %1028 = vadd.xlane.f32.xlu0 %v1027
    %v1029 = vpop.xlane.xlu0 %1028
    %v1030 = vmul.f32 %v1029, 0.125
    %1031 = vmatprep.subr.mxu0 0.0
    %1032 = vmatpush1.msra.mxu0 %v1030
    %1033 = vmatprep.subr.mxu0 0.0
    %1034 = vmatpush1.msra.mxu0 0.0
    %1035 = vmatprep.subr.mxu0 0.0
    %1036 = vmatpush1.msra.mxu0 0.0
    %1037 = vmatprep.subr.mxu0 0.0
    %1038 = vmatpush1.msra.mxu0 0.0
    %1039 = vmatprep.subr.mxu0 0.0
    %1040 = vmatpush1.msra.mxu0 0.0
    %1041 = vmatprep.subr.mxu0 0.0
    %1042 = vmatpush1.msra.mxu0 0.0
    %1043 = vmatprep.subr.mxu0 0.0
    %1044 = vmatpush1.msra.mxu0 0.0
    %1045 = vmatprep.subr.mxu0 0.0
    %1046 = vmatpush1.msra.mxu0 0.0
    %1047 = vmatprep.subr.mxu0 0.0
    %1048 = vmatpush1.msra.mxu0 0.0
    %1049 = vmatprep.subr.mxu0 0.0
    %1050 = vmatpush1.msra.mxu0 0.0
    %1051 = vmatprep.subr.mxu0 0.0
    %1052 = vmatpush1.msra.mxu0 0.0
    %1053 = vmatprep.subr.mxu0 0.0
    %1054 = vmatpush1.msra.mxu0 0.0
    %1055 = vmatprep.subr.mxu0 0.0
    %1056 = vmatpush1.msra.mxu0 0.0
    %1057 = vmatprep.subr.mxu0 0.0
    %1058 = vmatpush1.msra.mxu0 0.0
    %1059 = vmatprep.subr.mxu0 0.0
    %1060 = vmatpush1.msra.mxu0 0.0
    %1061 = vmatprep.subr.mxu0 0.0
    %1062 = vmatpush1.msra.mxu0 0.0
    %1063 = vmatprep.subr.mxu0 0.0
    %1064 = vmatpush1.msra.mxu0 0.0
    %1065 = vmatprep.subr.mxu0 0.0
    %1066 = vmatpush1.msra.mxu0 0.0
    %1067 = vmatprep.subr.mxu0 0.0
    %1068 = vmatpush1.msra.mxu0 0.0
    %1069 = vmatprep.subr.mxu0 0.0
    %1070 = vmatpush1.msra.mxu0 0.0
    %1071 = vmatprep.subr.mxu0 0.0
    %1072 = vmatpush1.msra.mxu0 0.0
    %1073 = vmatprep.subr.mxu0 0.0
    %1074 = vmatpush1.msra.mxu0 0.0
    %1075 = vmatprep.subr.mxu0 0.0
    %1076 = vmatpush1.msra.mxu0 0.0
    %1077 = vmatprep.subr.mxu0 0.0
    %1078 = vmatpush1.msra.mxu0 0.0
    %1079 = vmatprep.subr.mxu0 0.0
    %1080 = vmatpush1.msra.mxu0 0.0
    %1081 = vmatprep.subr.mxu0 0.0
    %1082 = vmatpush1.msra.mxu0 0.0
    %1083 = vmatprep.subr.mxu0 0.0
    %1084 = vmatpush1.msra.mxu0 0.0
    %1085 = vmatprep.subr.mxu0 0.0
    %1086 = vmatpush1.msra.mxu0 0.0
    %1087 = vmatprep.subr.mxu0 0.0
    %1088 = vmatpush1.msra.mxu0 0.0
    %1089 = vmatprep.subr.mxu0 0.0
    %1090 = vmatpush1.msra.mxu0 0.0
    %1091 = vmatprep.subr.mxu0 0.0
    %1092 = vmatpush1.msra.mxu0 0.0
    %1093 = vmatprep.subr.mxu0 0.0
    %1094 = vmatpush1.msra.mxu0 0.0
    %1095 = vmatprep.mubr.f32.mxu0 0.0
    %1096 = vmatmul.mubr.f32.gmra.mrb[0].mxu0 %v938
    %v1097 = vpop.f32.mrb[0].mxu0
    %v1098 = vadd.f32 %v926, %v1097
    %v1099 = vpop.f32.mrb[0].mxu0
    %1100 = vdwg.mxu0
    %v1101 = vxor.u32 %v1098, 2147483648
    %v1102 = vmul.f32 %v1101, 1.442695
    %v1103 = vpow.pop %v1102
    %v1104 = vadd.f32 %v1103, 1.0
    %v1105 = vrcp.pop %v1104
    %v1106 = vmul.f32 1.0, %v1105
    %1108 = vset.pattern.permute.xlu0 0
    %1109 = vperm.xlu0 %1108, %v1106
    %v1110 = vpop.permute.xlu0 %1109
    %v1112 = vmul.f32 %v1110, %v1026
    %v1113 = vadd.f32 %v1022, %v1112
    %v1114 = vadd.f32 %v924, 1.0
    %v1115 = vmul.f32 %v1114, %v1113
    %1116 = vst [vmem:[#allocation2] sm:$0xff] %v1115
    // Predicated region
    $region70: #{tpu_custom_call.1} parent=1 // pred_check
      _
    $region71: #{tpu_custom_call.1} parent=1 // pred_check_branch
      %1118 = sbr.rel (0) target = $region73
    $region72: #{tpu_custom_call.1} parent=1 // pred_region
      %s1120 = ssub.s32 128, 128
      %1121 = vsyncadd [#allocation3], %s1120
      %s1123 = sshll.u32 [#allocation2], 4
      %s1124 = int_to_ptr.vmem [resolvable:$true] %s1123
      %1126 = dma.vmem_to_hbm [thread:$0]  %s1124, 128, %s17, [#allocation3]
    $region73: #{tpu_custom_call.1} parent=1 // pred_fallthru
      _
    // Predicated region
    $region74: #{tpu_custom_call.1} parent=1 // pred_check
      _
    $region75: #{tpu_custom_call.1} parent=1 // pred_check_branch
      %1128 = sbr.rel (0) target = $region77
    $region76: #{tpu_custom_call.1} parent=1 // pred_region
      %1129 = dma.done [#allocation3], 128
    $region77: #{tpu_custom_call.1} parent=1 // pred_fallthru
      _
    %1130 = vsyncpa [#allocation3], 1

</llo_original>
